<compile_context>
chip_gen: v6e
topology: v6e:2x2x1
jax: 0.10.0
libtpu: 0.0.40
codegen_flags: <defaults>
</compile_context>

<pallas_src>
import functools
import math

import jax
import jax.numpy as jnp
from jax import lax
from jax.experimental import pallas as pl
from jax.experimental.pallas import tpu as pltpu

_EPS = 1e-8                      # torch.nn.CosineSimilarity default eps
_VMEM_LIMIT = 48 * 1024 * 1024   # safe on v5e/v6e (128 MiB) and v7x (64 MiB)
_HIGHEST = lax.Precision.HIGHEST
_NT = (((1,), (1,)), ((), ()))   # contract last axis of both operands (A @ B.T)


def _round_up(x, m):
    return ((x + m - 1) // m) * m


# ---------------------------------------------------------------------------
# Row-wise kernel: cos(x[i], y[i]) for (N, H) inputs -> (N,)
# ---------------------------------------------------------------------------
def _cos_rows_kernel(x_ref, y_ref, o_ref, *, inv_temp):
    # x_ref / y_ref: (TM, H) tiles; o_ref: (1, TM) lane-dense output tile.
    x = x_ref[...].astype(jnp.float32)
    y = y_ref[...].astype(jnp.float32)
    ones = jnp.ones((1, x.shape[-1]), jnp.float32)
    # Row reductions as 1xHxTM matmuls: results land lane-oriented (1, TM),
    # so the output store is a dense, unmasked vst (no (TM,1) masked stores).
    dot = lax.dot_general(ones, x * y, _NT, precision=_HIGHEST,
                          preferred_element_type=jnp.float32)
    nx2 = lax.dot_general(ones, x * x, _NT, precision=_HIGHEST,
                          preferred_element_type=jnp.float32)
    ny2 = lax.dot_general(ones, y * y, _NT, precision=_HIGHEST,
                          preferred_element_type=jnp.float32)
    # cos = dot / max(|x||y|, eps)  ==  dot * rsqrt(max(|x|^2*|y|^2, eps^2))
    denom2 = jnp.maximum(nx2 * ny2, _EPS * _EPS)
    o_ref[...] = (dot * lax.rsqrt(denom2) * inv_temp).astype(o_ref.dtype)


def _pick_row_tile(n, h, itemsize):
    # Largest multiple-of-128 row tile whose double-buffered inputs fit a
    # conservative VMEM budget (v7x only has 64 MiB physical VMEM).
    budget = 24 * 1024 * 1024
    per_row = 2 * 2 * h * itemsize          # 2 inputs x 2 pipeline buffers
    tm = max(128, min(1024, (budget // max(per_row, 1)) // 128 * 128))
    return min(tm, _round_up(n, 128))


def _cosine_sim_rows(x2d, y2d, temp):
    """Row-wise cosine similarity over the last axis of (N, H) inputs, / temp."""
    n, h = x2d.shape
    tm = _pick_row_tile(n, h, x2d.dtype.itemsize)
    n_pad = _round_up(n, tm)
    if n_pad != n:
        x2d = jnp.pad(x2d, ((0, n_pad - n), (0, 0)))
        y2d = jnp.pad(y2d, ((0, n_pad - n), (0, 0)))
    kernel = functools.partial(_cos_rows_kernel, inv_temp=1.0 / float(temp))
    out = pl.pallas_call(
        kernel,
        out_shape=jax.ShapeDtypeStruct((1, n_pad), jnp.float32),
        grid_spec=pltpu.PrefetchScalarGridSpec(
            num_scalar_prefetch=0,
            grid=(n_pad // tm,),
            in_specs=[
                pl.BlockSpec((tm, h), lambda i: (i, 0)),
                pl.BlockSpec((tm, h), lambda i: (i, 0)),
            ],
            out_specs=pl.BlockSpec((1, tm), lambda i: (0, i)),
        ),
        compiler_params=pltpu.CompilerParams(
            dimension_semantics=("parallel",),
            vmem_limit_bytes=_VMEM_LIMIT),
    )(x2d, y2d)
    return out[0, :n]


# ---------------------------------------------------------------------------
# Outer-product ("SimCSE") kernel: cos(x[i], y[j]) for (M,H) x (N,H) -> (M,N)
# ---------------------------------------------------------------------------
def _cos_matmul_kernel(x_ref, y_ref, o_ref, acc_ref, nx2_ref, ny2_ref, *,
                       inv_temp):
    # x_ref: (TM, TK), y_ref: (TN, TK), o_ref: (TM, TN); K is the last grid axis.
    k = pl.program_id(2)

    @pl.when(k == 0)
    def _():
        acc_ref[...] = jnp.zeros_like(acc_ref)
        nx2_ref[...] = jnp.zeros_like(nx2_ref)
        ny2_ref[...] = jnp.zeros_like(ny2_ref)

    x = x_ref[...]
    y = y_ref[...]
    # Dot products on the MXU (operands fed in their native dtype, f32 acc).
    acc_ref[...] += lax.dot_general(x, y, _NT, precision=_HIGHEST,
                                    preferred_element_type=jnp.float32)

    xf = x.astype(jnp.float32)
    yf = y.astype(jnp.float32)
    nx2_ref[...] += jnp.sum(xf * xf, axis=-1, keepdims=True)        # (TM, 1)
    ones = jnp.ones((1, yf.shape[-1]), jnp.float32)
    ny2_ref[...] += lax.dot_general(ones, yf * yf, _NT, precision=_HIGHEST,
                                    preferred_element_type=jnp.float32)  # (1, TN)

    @pl.when(k == pl.num_programs(2) - 1)
    def _():
        denom2 = jnp.maximum(nx2_ref[...] * ny2_ref[...], _EPS * _EPS)
        o_ref[...] = (acc_ref[...] * lax.rsqrt(denom2)
                      * inv_temp).astype(o_ref.dtype)


def _cosine_sim_matmul(x2d, y2d, temp, tm=256, tn=256, tk=512):
    """Outer-product cosine similarity: (M, H) x (N, H) -> (M, N), / temp."""
    m, h = x2d.shape
    n, _ = y2d.shape
    tm = min(tm, _round_up(m, 8))      # sublane-aligned M tile
    tn = min(tn, _round_up(n, 128))    # lane-dense output tile (mult. of 128)
    tk = min(tk, _round_up(h, 128))    # K (reduction) tile, last grid axis
    m_pad, n_pad, h_pad = _round_up(m, tm), _round_up(n, tn), _round_up(h, tk)
    if (m_pad, h_pad) != (m, h):
        x2d = jnp.pad(x2d, ((0, m_pad - m), (0, h_pad - h)))
    if (n_pad, h_pad) != (n, h):
        y2d = jnp.pad(y2d, ((0, n_pad - n), (0, h_pad - h)))
    kernel = functools.partial(_cos_matmul_kernel, inv_temp=1.0 / float(temp))
    out = pl.pallas_call(
        kernel,
        out_shape=jax.ShapeDtypeStruct((m_pad, n_pad), jnp.float32),
        grid_spec=pltpu.PrefetchScalarGridSpec(
            num_scalar_prefetch=0,
            grid=(m_pad // tm, n_pad // tn, h_pad // tk),
            in_specs=[
                pl.BlockSpec((tm, tk), lambda i, j, k: (i, k)),
                pl.BlockSpec((tn, tk), lambda i, j, k: (j, k)),
            ],
            out_specs=pl.BlockSpec((tm, tn), lambda i, j, k: (i, j)),
            scratch_shapes=[
                pltpu.VMEM((tm, tn), jnp.float32),   # dot-product accumulator
                pltpu.VMEM((tm, 1), jnp.float32),    # sum(x^2) accumulator
                pltpu.VMEM((1, tn), jnp.float32),    # sum(y^2) accumulator
            ],
        ),
        compiler_params=pltpu.CompilerParams(
            dimension_semantics=("parallel", "parallel", "arbitrary"),
            vmem_limit_bytes=_VMEM_LIMIT),
    )(x2d, y2d)
    return out[:m, :n]


# ---------------------------------------------------------------------------
# Module wrapper
# ---------------------------------------------------------------------------
def _outer_split(lx, ly, out_lead):
    """Find split point p so that dims < p come only from x and dims >= p only
    from y (pure outer-product broadcast, e.g. (B,1) vs (1,B)). None if not."""
    nd = len(out_lead)
    lxa = (1,) * (nd - len(lx)) + tuple(lx)
    lya = (1,) * (nd - len(ly)) + tuple(ly)
    for p in range(nd + 1):
        if all(d == 1 for d in lya[:p]) and all(d == 1 for d in lxa[p:]):
            return p
    return None


class Similarity:
    """JAX/Pallas equivalent of the PyTorch Similarity module (cosine / temp)."""

    def __init__(self, temp):
        self.temp = float(temp)

    def __call__(self, x, y):
        x = jnp.asarray(x)
        y = jnp.asarray(y)
        h = x.shape[-1]
        if y.shape[-1] != h:
            raise ValueError("feature (last) dims of x and y must match")
        lx, ly = x.shape[:-1], y.shape[:-1]
        out_lead = tuple(jnp.broadcast_shapes(lx, ly))
        if math.prod(out_lead) == 0:
            return jnp.zeros(out_lead, jnp.float32)

        if lx == ly:
            # No broadcasting: plain row-wise cosine similarity.
            sims = _cosine_sim_rows(x.reshape(-1, h), y.reshape(-1, h), self.temp)
            return sims.reshape(out_lead)

        p = _outer_split(lx, ly, out_lead)
        if p is not None:
            # Outer-product broadcast (SimCSE): MXU matmul path, no O(M*N*H)
            # materialization.
            m = math.prod(out_lead[:p])
            n = math.prod(out_lead[p:])
            mat = _cosine_sim_matmul(x.reshape(m, h), y.reshape(n, h), self.temp)
            return mat.reshape(out_lead)

        # TODO(synk): interleaved leading-dim broadcasts (rare) fall back to
        # materialization + the row-wise kernel.
        xb = jnp.broadcast_to(x, out_lead + (h,)).reshape(-1, h)
        yb = jnp.broadcast_to(y, out_lead + (h,)).reshape(-1, h)
        sims = _cosine_sim_rows(xb, yb, self.temp)
        return sims.reshape(out_lead)


if __name__ == "__main__":
    key = jax.random.PRNGKey(0)
    kx, ky, ka, kb = jax.random.split(key, 4)

    temp = 0.05
    sim = Similarity(temp)

    # 1) SimCSE-style broadcast: x (B, 1, H) vs y (1, B, H) -> (B, B) matrix.
    B, H = 8, 32
    x = jax.random.normal(kx, (B, 1, H), dtype=jnp.float32)
    y = jax.random.normal(ky, (1, B, H), dtype=jnp.float32)
    out = jax.block_until_ready(sim(x, y))

    xb = jnp.broadcast_to(x, (B, B, H))
    yb = jnp.broadcast_to(y, (B, B, H))
    ref = (jnp.sum(xb * yb, -1)
           / jnp.maximum(jnp.linalg.norm(xb, axis=-1)
                         * jnp.linalg.norm(yb, axis=-1), _EPS) / temp)
    assert out.shape == (B, B)
    assert jnp.allclose(out, ref, atol=1e-3, rtol=1e-3)

    # 2) Same-shape (row-wise) case with a non-tile-aligned row count.
    Bs, S = 2, 5
    xr = jax.random.normal(ka, (Bs, S, H), dtype=jnp.float32)
    yr = jax.random.normal(kb, (Bs, S, H), dtype=jnp.float32)
    outr = jax.block_until_ready(sim(xr, yr))

    refr = (jnp.sum(xr * yr, -1)
            / jnp.maximum(jnp.linalg.norm(xr, axis=-1)
                          * jnp.linalg.norm(yr, axis=-1), _EPS) / temp)
    assert outr.shape == (Bs, S)
    assert jnp.allclose(outr, refr, atol=1e-3, rtol=1e-3)

    print("KERNEL_OK")
</pallas_src>

<mosaic_0001>
module attributes {stable_mosaic.version = 11 : i64} {
  func.func @_cos_matmul_kernel(%arg0: i32, %arg1: i32, %arg2: i32, %arg3: memref<8x128xf32, #tpu.memory_space<vmem>>, %arg4: memref<128x128xf32, #tpu.memory_space<vmem>>, %arg5: memref<8x128xf32, #tpu.memory_space<vmem>>, %arg6: memref<8x128xf32, #tpu.memory_space<vmem>>, %arg7: memref<8x1xf32, #tpu.memory_space<vmem>>, %arg8: memref<1x128xf32, #tpu.memory_space<vmem>>) attributes {dimension_semantics = [#tpu.dimension_semantics<parallel>, #tpu.dimension_semantics<parallel>, #tpu.dimension_semantics<arbitrary>], iteration_bounds = array<i64: 1, 1, 1>, scalar_prefetch = 0 : i64, scratch_operands = 3 : i64, tpu.core_type = #tpu.core_type<tc>, window_params = [{transform_indices = @transform_0, window_bounds = array<i64: 8, 128>}, {transform_indices = @transform_1, window_bounds = array<i64: 128, 128>}, {transform_indices = @transform_2, window_bounds = array<i64: 8, 128>}]} {
    %c0_i32 = arith.constant 0 : i32
    %0 = arith.cmpi eq, %arg2, %c0_i32 : i32
    %1 = arith.extui %0 : i1 to i32
    %c0_i32_0 = arith.constant 0 : i32
    %2 = arith.cmpi ne, %1, %c0_i32_0 : i32
    scf.if %2 {
      %cst_21 = arith.constant 0.000000e+00 : f32
      %24 = vector.broadcast %cst_21 : f32 to vector<8x128xf32>
      %c0_22 = arith.constant 0 : index
      %c0_23 = arith.constant 0 : index
      %25 = vector.load %arg6[%c0_22, %c0_23] : memref<8x128xf32, #tpu.memory_space<vmem>>, vector<8x128xf32>
      tpu.vector_store %arg6[%c0_22, %c0_23], %24 {strides = array<i32>} : memref<8x128xf32, #tpu.memory_space<vmem>>, vector<8x128xf32>,
      %cst_24 = arith.constant 0.000000e+00 : f32
      %26 = vector.broadcast %cst_24 : f32 to vector<8x1xf32>
      %c0_25 = arith.constant 0 : index
      %c0_26 = arith.constant 0 : index
      %27 = vector.load %arg7[%c0_25, %c0_26] : memref<8x1xf32, #tpu.memory_space<vmem>>, vector<8x1xf32>
      tpu.vector_store %arg7[%c0_25, %c0_26], %26 {strides = array<i32>} : memref<8x1xf32, #tpu.memory_space<vmem>>, vector<8x1xf32>,
      %cst_27 = arith.constant 0.000000e+00 : f32
      %28 = vector.broadcast %cst_27 : f32 to vector<1x128xf32>
      %c0_28 = arith.constant 0 : index
      %c0_29 = arith.constant 0 : index
      %29 = vector.load %arg8[%c0_28, %c0_29] : memref<1x128xf32, #tpu.memory_space<vmem>>, vector<1x128xf32>
      tpu.vector_store %arg8[%c0_28, %c0_29], %28 {strides = array<i32>} : memref<1x128xf32, #tpu.memory_space<vmem>>, vector<1x128xf32>,
    } else {
    }
    %c0 = arith.constant 0 : index
    %c0_1 = arith.constant 0 : index
    %3 = vector.load %arg3[%c0, %c0_1] : memref<8x128xf32, #tpu.memory_space<vmem>>, vector<8x128xf32>
    %c0_2 = arith.constant 0 : index
    %c0_3 = arith.constant 0 : index
    %4 = vector.load %arg4[%c0_2, %c0_3] : memref<128x128xf32, #tpu.memory_space<vmem>>, vector<128x128xf32>
    %c0_4 = arith.constant 0 : index
    %c0_5 = arith.constant 0 : index
    %5 = vector.load %arg6[%c0_4, %c0_5] : memref<8x128xf32, #tpu.memory_space<vmem>>, vector<8x128xf32>
    %cst = arith.constant dense<0.000000e+00> : vector<8x128xf32>
    %6 = tpu.matmul %3, %4, %cst {dimension_numbers = #tpu.dot_dimension_numbers<[1], [1], [0], [0], [0, 0, 1, 0], [], []>, precision = #tpu.contract_precision<fp32>} : vector<8x128xf32>, vector<128x128xf32>, vector<8x128xf32> -> vector<8x128xf32>
    %7 = arith.addf %5, %6 : vector<8x128xf32>
    %c0_6 = arith.constant 0 : index
    %c0_7 = arith.constant 0 : index
    %8 = vector.load %arg6[%c0_6, %c0_7] : memref<8x128xf32, #tpu.memory_space<vmem>>, vector<8x128xf32>
    tpu.vector_store %arg6[%c0_6, %c0_7], %7 {strides = array<i32>} : memref<8x128xf32, #tpu.memory_space<vmem>>, vector<8x128xf32>,
    %c0_8 = arith.constant 0 : index
    %c0_9 = arith.constant 0 : index
    %9 = vector.load %arg7[%c0_8, %c0_9] : memref<8x1xf32, #tpu.memory_space<vmem>>, vector<8x1xf32>
    %10 = arith.mulf %3, %3 : vector<8x128xf32>
    %cst_10 = arith.constant dense<0.000000e+00> : vector<8xf32>
    %11 = vector.multi_reduction <add>, %10, %cst_10 [1] : vector<8x128xf32> to vector<8xf32>
    %12 = vector.shape_cast %11 : vector<8xf32> to vector<8x1xf32>
    %13 = arith.addf %9, %12 : vector<8x1xf32>
    %c0_11 = arith.constant 0 : index
    %c0_12 = arith.constant 0 : index
    %14 = vector.load %arg7[%c0_11, %c0_12] : memref<8x1xf32, #tpu.memory_space<vmem>>, vector<8x1xf32>
    tpu.vector_store %arg7[%c0_11, %c0_12], %13 {strides = array<i32>} : memref<8x1xf32, #tpu.memory_space<vmem>>, vector<8x1xf32>,
    %cst_13 = arith.constant 1.000000e+00 : f32
    %15 = vector.broadcast %cst_13 : f32 to vector<1x128xf32>
    %c0_14 = arith.constant 0 : index
    %c0_15 = arith.constant 0 : index
    %16 = vector.load %arg8[%c0_14, %c0_15] : memref<1x128xf32, #tpu.memory_space<vmem>>, vector<1x128xf32>
    %17 = arith.mulf %4, %4 : vector<128x128xf32>
    %cst_16 = arith.constant dense<0.000000e+00> : vector<1x128xf32>
    %18 = tpu.matmul %15, %17, %cst_16 {dimension_numbers = #tpu.dot_dimension_numbers<[1], [1], [0], [0], [0, 0, 1, 0], [], []>, precision = #tpu.contract_precision<fp32>} : vector<1x128xf32>, vector<128x128xf32>, vector<1x128xf32> -> vector<1x128xf32>
    %19 = arith.addf %16, %18 : vector<1x128xf32>
    %c0_17 = arith.constant 0 : index
    %c0_18 = arith.constant 0 : index
    %20 = vector.load %arg8[%c0_17, %c0_18] : memref<1x128xf32, #tpu.memory_space<vmem>>, vector<1x128xf32>
    tpu.vector_store %arg8[%c0_17, %c0_18], %19 {strides = array<i32>} : memref<1x128xf32, #tpu.memory_space<vmem>>, vector<1x128xf32>,
    %c0_i32_19 = arith.constant 0 : i32
    %21 = arith.cmpi eq, %arg2, %c0_i32_19 : i32
    %22 = arith.extui %21 : i1 to i32
    %c0_i32_20 = arith.constant 0 : i32
    %23 = arith.cmpi ne, %22, %c0_i32_20 : i32
    scf.if %23 {
      %c0_21 = arith.constant 0 : index
      %c0_22 = arith.constant 0 : index
      %24 = vector.load %arg7[%c0_21, %c0_22] : memref<8x1xf32, #tpu.memory_space<vmem>>, vector<8x1xf32>
      %c0_23 = arith.constant 0 : index
      %c0_24 = arith.constant 0 : index
      %25 = vector.load %arg8[%c0_23, %c0_24] : memref<1x128xf32, #tpu.memory_space<vmem>>, vector<1x128xf32>
      %26 = vector.broadcast %24 : vector<8x1xf32> to vector<8x128xf32>
      %27 = vector.broadcast %25 : vector<1x128xf32> to vector<8x128xf32>
      %28 = arith.mulf %26, %27 : vector<8x128xf32>
      %cst_25 = arith.constant 1.000000e-16 : f32
      %29 = vector.broadcast %cst_25 : f32 to vector<8x128xf32>
      %30 = arith.maximumf %28, %29 : vector<8x128xf32>
      %c0_26 = arith.constant 0 : index
      %c0_27 = arith.constant 0 : index
      %31 = vector.load %arg6[%c0_26, %c0_27] : memref<8x128xf32, #tpu.memory_space<vmem>>, vector<8x128xf32>
      %32 = math.rsqrt %30 : vector<8x128xf32>
      %33 = arith.mulf %31, %32 : vector<8x128xf32>
      %cst_28 = arith.constant 2.000000e+01 : f32
      %34 = vector.broadcast %cst_28 : f32 to vector<8x128xf32>
      %35 = arith.mulf %33, %34 : vector<8x128xf32>
      %c0_29 = arith.constant 0 : index
      %c0_30 = arith.constant 0 : index
      %36 = vector.load %arg5[%c0_29, %c0_30] : memref<8x128xf32, #tpu.memory_space<vmem>>, vector<8x128xf32>
      tpu.vector_store %arg5[%c0_29, %c0_30], %35 {strides = array<i32>} : memref<8x128xf32, #tpu.memory_space<vmem>>, vector<8x128xf32>,
    } else {
    }
    return
  }
  func.func @transform_0(%arg0: i32, %arg1: i32, %arg2: i32) -> (i32, i32) {
    %c0_i32 = arith.constant 0 : i32
    return %arg0, %arg2 : i32, i32
  }
  func.func @transform_1(%arg0: i32, %arg1: i32, %arg2: i32) -> (i32, i32) {
    %c0_i32 = arith.constant 0 : i32
    return %arg1, %arg2 : i32, i32
  }
  func.func @transform_2(%arg0: i32, %arg1: i32, %arg2: i32) -> (i32, i32) {
    %c0_i32 = arith.constant 0 : i32
    return %arg0, %arg1 : i32, i32
  }
}

</mosaic_0001>

<llo_original>
// kernel: tpu_custom_call.1
$region0: #{tpu_custom_call.1}
  #allocation0 [shape = 'u32[]', space=smem, size = 0x4, offset = 0x4, fixed_abs, tag = 'smem constant byte address 0x4 - core index']
  #allocation1 [shape = 'u32[144,128]{1,0:T(1,128)}', space=vmem, size = 0x12000, scoped, tag = 'internal scratch']
  #allocation2 [shape = 'f32[8,128]{1,0:T(8,128)}', space=vmem, size = 0x1000, scoped, tag = 'scratch operand']
  #allocation3 [shape = 'f32[8,1]{1,0:T(8,128)}', space=vmem, size = 0x1000, scoped, tag = 'scratch operand']
  #allocation4 [shape = 'f32[1,128]{1,0:T(1,128)}', space=vmem, size = 0x200, scoped, tag = 'scratch operand']
  %s0 = inlined_call_operand.hbm [shape: f32[8,128], index: 0, kind: input, shape index: {}]
  %s1 = inlined_call_operand.hbm [shape: f32[128,128], index: 1, kind: input, shape index: {}]
  %s2 = inlined_call_operand.hbm [shape: f32[8,128], index: 2, kind: output, shape index: {}]
  %s3 = sld [smem:[#allocation0]]
  $region34: #{tpu_custom_call.1} parent=0
    _
  %s5 = ssub.s32 1, %s3
  %s6 = scalar_select 0, %s5, %s3
  $region1: #{tpu_custom_call.1} parent=0
    #allocation5 [shape = 'u8[4096]{0}', space=vmem, size = 0x1000, scoped, tag = 'input window, operand 0, single buffered']
    #allocation6 [shape = 's32[1]{0}', space=sflag, size = 0x4, scoped, tag = 'scoped memory for tpu_custom_call.1']
    #allocation7 [shape = 's32[1]{0}', space=sflag, size = 0x4, scoped, tag = 'scoped memory for tpu_custom_call.1']
    #allocation8 [shape = 'u8[65536]{0}', space=vmem, size = 0x10000, scoped, tag = 'input window, operand 1, single buffered']
    #allocation9 [shape = 's32[1]{0}', space=sflag, size = 0x4, scoped, tag = 'scoped memory for tpu_custom_call.1']
    #allocation10 [shape = 'u8[4096]{0}', space=vmem, size = 0x1000, scoped, tag = 'output window, operand 0, single buffered']
    %7 = vsyncpa [#allocation6], 0
    %8 = vsyncpa [#allocation9], 0
    %9 = vsyncpa [#allocation7], 0
    // Predicated region
    $region2: #{tpu_custom_call.1} parent=1 // pred_check
      _
    $region3: #{tpu_custom_call.1} parent=1 // pred_check_branch
      %11 = sbr.rel (0) target = $region5
    $region4: #{tpu_custom_call.1} parent=1 // pred_region
      %s13 = ssub.s32 128, 128
      %14 = vsyncadd [#allocation6], %s13
      %s16 = sshll.u32 [#allocation5], 4
      %s17 = int_to_ptr.vmem [resolvable:$true] %s16
      %19 = dma.hbm_to_vmem [thread:$0]  %s0, 128, %s17, [#allocation6]
    $region5: #{tpu_custom_call.1} parent=1 // pred_fallthru
      _
    // Predicated region
    $region6: #{tpu_custom_call.1} parent=1 // pred_check
      _
    $region7: #{tpu_custom_call.1} parent=1 // pred_check_branch
      %21 = sbr.rel (0) target = $region9
    $region8: #{tpu_custom_call.1} parent=1 // pred_region
      %s23 = ssub.s32 2048, 2048
      %24 = vsyncadd [#allocation9], %s23
      %s25 = sshll.u32 [#allocation8], 4
      %s26 = int_to_ptr.vmem [resolvable:$true] %s25
      %31 = dma.hbm_to_vmem [thread:$0]  %s1, 2048, %s26, [#allocation9], 128, 128, 8
    $region9: #{tpu_custom_call.1} parent=1 // pred_fallthru
      _
    // Predicated region
    $region10: #{tpu_custom_call.1} parent=1 // pred_check
      _
    $region11: #{tpu_custom_call.1} parent=1 // pred_check_branch
      %33 = sbr.rel (0) target = $region13
    $region12: #{tpu_custom_call.1} parent=1 // pred_region
      %34 = dma.done [#allocation6], 128
    $region13: #{tpu_custom_call.1} parent=1 // pred_fallthru
      _
    // Predicated region
    $region14: #{tpu_custom_call.1} parent=1 // pred_check
      _
    $region15: #{tpu_custom_call.1} parent=1 // pred_check_branch
      %36 = sbr.rel (0) target = $region17
    $region16: #{tpu_custom_call.1} parent=1 // pred_region
      %37 = dma.done [#allocation9], 2048
    $region17: #{tpu_custom_call.1} parent=1 // pred_fallthru
      _
    %p38 = scmp.eq.s32.totalorder 0, 0
    // Predicated region
    $region18: #{tpu_custom_call.1} parent=1 // pred_check
      %p39 = pneg %p38
    $region19: #{tpu_custom_call.1} parent=1 // pred_check_branch
      %41 = sbr.rel (%p39) target = $region21
    $region20: #{tpu_custom_call.1} parent=1 // pred_region
      %42 = vst [vmem:[#allocation2] sm:$0xff] 0.0
      %vm43 = vcmask 7168
      %44 = vst.msk [vmem:[#allocation3] sm:$0xff] %vm43, 0.0
      %45 = vst [vmem:[#allocation4] sm:$0x1] 0.0
    $region21: #{tpu_custom_call.1} parent=1 // pred_fallthru
      _
    %v46 = vld [vmem:[#allocation5] sm:$0xff]
    %v47 = vld [vmem:[#allocation8] sm:$0xff]
    %v48 = vld [vmem:[#allocation8 + $0x8] sm:$0xff]
    %v49 = vld [vmem:[#allocation8 + $0x10] sm:$0xff]
    %v50 = vld [vmem:[#allocation8 + $0x18] sm:$0xff]
    %v51 = vld [vmem:[#allocation8 + $0x20] sm:$0xff]
    %v52 = vld [vmem:[#allocation8 + $0x28] sm:$0xff]
    %v53 = vld [vmem:[#allocation8 + $0x30] sm:$0xff]
    %v54 = vld [vmem:[#allocation8 + $0x38] sm:$0xff]
    %v55 = vld [vmem:[#allocation8 + $0x40] sm:$0xff]
    %v56 = vld [vmem:[#allocation8 + $0x48] sm:$0xff]
    %v57 = vld [vmem:[#allocation8 + $0x50] sm:$0xff]
    %v58 = vld [vmem:[#allocation8 + $0x58] sm:$0xff]
    %v59 = vld [vmem:[#allocation8 + $0x60] sm:$0xff]
    %v60 = vld [vmem:[#allocation8 + $0x68] sm:$0xff]
    %v61 = vld [vmem:[#allocation8 + $0x70] sm:$0xff]
    %v62 = vld [vmem:[#allocation8 + $0x78] sm:$0xff]
    %v63 = vld [vmem:[#allocation2] sm:$0xff]
    %64 = vmatprep.subr.mxu0 0.0
    %v65 = vand.u32 %v62, 4294901760
    %66 = vmatpush1.xpose.msra.mxu0 %v65
    %67 = vmatprep.subr.mxu0 0.0
    %v68 = vand.u32 %v61, 4294901760
    %69 = vmatpush1.xpose.msra.mxu0 %v68
    %70 = vmatprep.subr.mxu0 0.0
    %v71 = vand.u32 %v60, 4294901760
    %72 = vmatpush1.xpose.msra.mxu0 %v71
    %73 = vmatprep.subr.mxu0 0.0
    %v74 = vand.u32 %v59, 4294901760
    %75 = vmatpush1.xpose.msra.mxu0 %v74
    %76 = vmatprep.subr.mxu0 0.0
    %v77 = vand.u32 %v58, 4294901760
    %78 = vmatpush1.xpose.msra.mxu0 %v77
    %79 = vmatprep.subr.mxu0 0.0
    %v80 = vand.u32 %v57, 4294901760
    %81 = vmatpush1.xpose.msra.mxu0 %v80
    %82 = vmatprep.subr.mxu0 0.0
    %v83 = vand.u32 %v56, 4294901760
    %84 = vmatpush1.xpose.msra.mxu0 %v83
    %85 = vmatprep.subr.mxu0 0.0
    %v86 = vand.u32 %v55, 4294901760
    %87 = vmatpush1.xpose.msra.mxu0 %v86
    %88 = vmatprep.subr.mxu0 0.0
    %v89 = vand.u32 %v54, 4294901760
    %90 = vmatpush1.xpose.msra.mxu0 %v89
    %91 = vmatprep.subr.mxu0 0.0
    %v92 = vand.u32 %v53, 4294901760
    %93 = vmatpush1.xpose.msra.mxu0 %v92
    %94 = vmatprep.subr.mxu0 0.0
    %v95 = vand.u32 %v52, 4294901760
    %96 = vmatpush1.xpose.msra.mxu0 %v95
    %97 = vmatprep.subr.mxu0 0.0
    %v98 = vand.u32 %v51, 4294901760
    %99 = vmatpush1.xpose.msra.mxu0 %v98
    %100 = vmatprep.subr.mxu0 0.0
    %v101 = vand.u32 %v50, 4294901760
    %102 = vmatpush1.xpose.msra.mxu0 %v101
    %103 = vmatprep.subr.mxu0 0.0
    %v104 = vand.u32 %v49, 4294901760
    %105 = vmatpush1.xpose.msra.mxu0 %v104
    %106 = vmatprep.subr.mxu0 0.0
    %v107 = vand.u32 %v48, 4294901760
    %108 = vmatpush1.xpose.msra.mxu0 %v107
    %109 = vmatprep.subr.mxu0 0.0
    %v110 = vand.u32 %v47, 4294901760
    %111 = vmatpush1.xpose.msra.mxu0 %v110
    %112 = vmatprep.subr.mxu0 0.0
    %113 = vmatpush2.xpose.msra.mxu0 0.0
    %114 = vmatprep.subr.mxu0 0.0
    %115 = vmatpush2.xpose.msra.mxu0 0.0
    %116 = vmatprep.subr.mxu0 0.0
    %117 = vmatpush2.xpose.msra.mxu0 0.0
    %118 = vmatprep.subr.mxu0 0.0
    %119 = vmatpush2.xpose.msra.mxu0 0.0
    %120 = vmatprep.subr.mxu0 0.0
    %121 = vmatpush2.xpose.msra.mxu0 0.0
    %122 = vmatprep.subr.mxu0 0.0
    %123 = vmatpush2.xpose.msra.mxu0 0.0
    %124 = vmatprep.subr.mxu0 0.0
    %125 = vmatpush2.xpose.msra.mxu0 0.0
    %126 = vmatprep.subr.mxu0 0.0
    %127 = vmatpush2.xpose.msra.mxu0 0.0
    %128 = vmatprep.subr.mxu0 0.0
    %129 = vmatpush2.xpose.msra.mxu0 0.0
    %130 = vmatprep.subr.mxu0 0.0
    %131 = vmatpush2.xpose.msra.mxu0 0.0
    %132 = vmatprep.subr.mxu0 0.0
    %133 = vmatpush2.xpose.msra.mxu0 0.0
    %134 = vmatprep.subr.mxu0 0.0
    %135 = vmatpush2.xpose.msra.mxu0 0.0
    %136 = vmatprep.subr.mxu0 0.0
    %137 = vmatpush2.xpose.msra.mxu0 0.0
    %138 = vmatprep.subr.mxu0 0.0
    %139 = vmatpush2.xpose.msra.mxu0 0.0
    %140 = vmatprep.subr.mxu0 0.0
    %141 = vmatpush2.xpose.msra.mxu0 0.0
    %142 = vmatprep.subr.mxu0 0.0
    %143 = vmatpush2.xpose.msra.mxu0 0.0
    %144 = vmatprep.mubr.f32.mxu0 0.0
    %v145 = vand.u32 %v46, 4294901760
    %v146 = vsub.f32 %v46, %v145
    %v147 = vand.u32 %v146, 4294901760
    %v148 = vsub.f32 %v146, %v147
    %v149 = vand.u32 %v148, 4294901760
    %150 = vmatmul.mubr.f32.gmra.mxu0 %v149
    %v151 = vpop.f32.mrf.mxu0
    %v152 = vadd.f32 0.0, %v151
    %v153 = vpop.f32.mrf.mxu0
    %154 = vdwg.mxu0
    %155 = vmatprep.subr.mxu0 0.0
    %v156 = vand.u32 %v62, 4294901760
    %v157 = vsub.f32 %v62, %v156
    %v158 = vand.u32 %v157, 4294901760
    %v159 = vsub.f32 %v157, %v158
    %v160 = vand.u32 %v159, 4294901760
    %161 = vmatpush1.xpose.msra.mxu0 %v160
    %162 = vmatprep.subr.mxu0 0.0
    %v163 = vand.u32 %v61, 4294901760
    %v164 = vsub.f32 %v61, %v163
    %v165 = vand.u32 %v164, 4294901760
    %v166 = vsub.f32 %v164, %v165
    %v167 = vand.u32 %v166, 4294901760
    %168 = vmatpush1.xpose.msra.mxu0 %v167
    %169 = vmatprep.subr.mxu0 0.0
    %v170 = vand.u32 %v60, 4294901760
    %v171 = vsub.f32 %v60, %v170
    %v172 = vand.u32 %v171, 4294901760
    %v173 = vsub.f32 %v171, %v172
    %v174 = vand.u32 %v173, 4294901760
    %175 = vmatpush1.xpose.msra.mxu0 %v174
    %176 = vmatprep.subr.mxu0 0.0
    %v177 = vand.u32 %v59, 4294901760
    %v178 = vsub.f32 %v59, %v177
    %v179 = vand.u32 %v178, 4294901760
    %v180 = vsub.f32 %v178, %v179
    %v181 = vand.u32 %v180, 4294901760
    %182 = vmatpush1.xpose.msra.mxu0 %v181
    %183 = vmatprep.subr.mxu0 0.0
    %v184 = vand.u32 %v58, 4294901760
    %v185 = vsub.f32 %v58, %v184
    %v186 = vand.u32 %v185, 4294901760
    %v187 = vsub.f32 %v185, %v186
    %v188 = vand.u32 %v187, 4294901760
    %189 = vmatpush1.xpose.msra.mxu0 %v188
    %190 = vmatprep.subr.mxu0 0.0
    %v191 = vand.u32 %v57, 4294901760
    %v192 = vsub.f32 %v57, %v191
    %v193 = vand.u32 %v192, 4294901760
    %v194 = vsub.f32 %v192, %v193
    %v195 = vand.u32 %v194, 4294901760
    %196 = vmatpush1.xpose.msra.mxu0 %v195
    %197 = vmatprep.subr.mxu0 0.0
    %v198 = vand.u32 %v56, 4294901760
    %v199 = vsub.f32 %v56, %v198
    %v200 = vand.u32 %v199, 4294901760
    %v201 = vsub.f32 %v199, %v200
    %v202 = vand.u32 %v201, 4294901760
    %203 = vmatpush1.xpose.msra.mxu0 %v202
    %204 = vmatprep.subr.mxu0 0.0
    %v205 = vand.u32 %v55, 4294901760
    %v206 = vsub.f32 %v55, %v205
    %v207 = vand.u32 %v206, 4294901760
    %v208 = vsub.f32 %v206, %v207
    %v209 = vand.u32 %v208, 4294901760
    %210 = vmatpush1.xpose.msra.mxu0 %v209
    %211 = vmatprep.subr.mxu0 0.0
    %v212 = vand.u32 %v54, 4294901760
    %v213 = vsub.f32 %v54, %v212
    %v214 = vand.u32 %v213, 4294901760
    %v215 = vsub.f32 %v213, %v214
    %v216 = vand.u32 %v215, 4294901760
    %217 = vmatpush1.xpose.msra.mxu0 %v216
    %218 = vmatprep.subr.mxu0 0.0
    %v219 = vand.u32 %v53, 4294901760
    %v220 = vsub.f32 %v53, %v219
    %v221 = vand.u32 %v220, 4294901760
    %v222 = vsub.f32 %v220, %v221
    %v223 = vand.u32 %v222, 4294901760
    %224 = vmatpush1.xpose.msra.mxu0 %v223
    %225 = vmatprep.subr.mxu0 0.0
    %v226 = vand.u32 %v52, 4294901760
    %v227 = vsub.f32 %v52, %v226
    %v228 = vand.u32 %v227, 4294901760
    %v229 = vsub.f32 %v227, %v228
    %v230 = vand.u32 %v229, 4294901760
    %231 = vmatpush1.xpose.msra.mxu0 %v230
    %232 = vmatprep.subr.mxu0 0.0
    %v233 = vand.u32 %v51, 4294901760
    %v234 = vsub.f32 %v51, %v233
    %v235 = vand.u32 %v234, 4294901760
    %v236 = vsub.f32 %v234, %v235
    %v237 = vand.u32 %v236, 4294901760
    %238 = vmatpush1.xpose.msra.mxu0 %v237
    %239 = vmatprep.subr.mxu0 0.0
    %v240 = vand.u32 %v50, 4294901760
    %v241 = vsub.f32 %v50, %v240
    %v242 = vand.u32 %v241, 4294901760
    %v243 = vsub.f32 %v241, %v242
    %v244 = vand.u32 %v243, 4294901760
    %245 = vmatpush1.xpose.msra.mxu0 %v244
    %246 = vmatprep.subr.mxu0 0.0
    %v247 = vand.u32 %v49, 4294901760
    %v248 = vsub.f32 %v49, %v247
    %v249 = vand.u32 %v248, 4294901760
    %v250 = vsub.f32 %v248, %v249
    %v251 = vand.u32 %v250, 4294901760
    %252 = vmatpush1.xpose.msra.mxu0 %v251
    %253 = vmatprep.subr.mxu0 0.0
    %v254 = vand.u32 %v48, 4294901760
    %v255 = vsub.f32 %v48, %v254
    %v256 = vand.u32 %v255, 4294901760
    %v257 = vsub.f32 %v255, %v256
    %v258 = vand.u32 %v257, 4294901760
    %259 = vmatpush1.xpose.msra.mxu0 %v258
    %260 = vmatprep.subr.mxu0 0.0
    %v261 = vand.u32 %v47, 4294901760
    %v262 = vsub.f32 %v47, %v261
    %v263 = vand.u32 %v262, 4294901760
    %v264 = vsub.f32 %v262, %v263
    %v265 = vand.u32 %v264, 4294901760
    %266 = vmatpush1.xpose.msra.mxu0 %v265
    %267 = vmatprep.subr.mxu0 0.0
    %268 = vmatpush2.xpose.msra.mxu0 0.0
    %269 = vmatprep.subr.mxu0 0.0
    %270 = vmatpush2.xpose.msra.mxu0 0.0
    %271 = vmatprep.subr.mxu0 0.0
    %272 = vmatpush2.xpose.msra.mxu0 0.0
    %273 = vmatprep.subr.mxu0 0.0
    %274 = vmatpush2.xpose.msra.mxu0 0.0
    %275 = vmatprep.subr.mxu0 0.0
    %276 = vmatpush2.xpose.msra.mxu0 0.0
    %277 = vmatprep.subr.mxu0 0.0
    %278 = vmatpush2.xpose.msra.mxu0 0.0
    %279 = vmatprep.subr.mxu0 0.0
    %280 = vmatpush2.xpose.msra.mxu0 0.0
    %281 = vmatprep.subr.mxu0 0.0
    %282 = vmatpush2.xpose.msra.mxu0 0.0
    %283 = vmatprep.subr.mxu0 0.0
    %284 = vmatpush2.xpose.msra.mxu0 0.0
    %285 = vmatprep.subr.mxu0 0.0
    %286 = vmatpush2.xpose.msra.mxu0 0.0
    %287 = vmatprep.subr.mxu0 0.0
    %288 = vmatpush2.xpose.msra.mxu0 0.0
    %289 = vmatprep.subr.mxu0 0.0
    %290 = vmatpush2.xpose.msra.mxu0 0.0
    %291 = vmatprep.subr.mxu0 0.0
    %292 = vmatpush2.xpose.msra.mxu0 0.0
    %293 = vmatprep.subr.mxu0 0.0
    %294 = vmatpush2.xpose.msra.mxu0 0.0
    %295 = vmatprep.subr.mxu0 0.0
    %296 = vmatpush2.xpose.msra.mxu0 0.0
    %297 = vmatprep.subr.mxu0 0.0
    %298 = vmatpush2.xpose.msra.mxu0 0.0
    %299 = vmatprep.mubr.f32.mxu0 0.0
    %v300 = vand.u32 %v46, 4294901760
    %301 = vmatmul.mubr.f32.gmra.mxu0 %v300
    %v302 = vpop.f32.mrf.mxu0
    %v303 = vadd.f32 %v152, %v302
    %v304 = vpop.f32.mrf.mxu0
    %305 = vdwg.mxu0
    %306 = vmatprep.subr.mxu0 0.0
    %v307 = vand.u32 %v62, 4294901760
    %v308 = vsub.f32 %v62, %v307
    %309 = vmatpush1.xpose.msra.mxu0 %v308
    %310 = vmatprep.subr.mxu0 0.0
    %v311 = vand.u32 %v61, 4294901760
    %v312 = vsub.f32 %v61, %v311
    %313 = vmatpush1.xpose.msra.mxu0 %v312
    %314 = vmatprep.subr.mxu0 0.0
    %v315 = vand.u32 %v60, 4294901760
    %v316 = vsub.f32 %v60, %v315
    %317 = vmatpush1.xpose.msra.mxu0 %v316
    %318 = vmatprep.subr.mxu0 0.0
    %v319 = vand.u32 %v59, 4294901760
    %v320 = vsub.f32 %v59, %v319
    %321 = vmatpush1.xpose.msra.mxu0 %v320
    %322 = vmatprep.subr.mxu0 0.0
    %v323 = vand.u32 %v58, 4294901760
    %v324 = vsub.f32 %v58, %v323
    %325 = vmatpush1.xpose.msra.mxu0 %v324
    %326 = vmatprep.subr.mxu0 0.0
    %v327 = vand.u32 %v57, 4294901760
    %v328 = vsub.f32 %v57, %v327
    %329 = vmatpush1.xpose.msra.mxu0 %v328
    %330 = vmatprep.subr.mxu0 0.0
    %v331 = vand.u32 %v56, 4294901760
    %v332 = vsub.f32 %v56, %v331
    %333 = vmatpush1.xpose.msra.mxu0 %v332
    %334 = vmatprep.subr.mxu0 0.0
    %v335 = vand.u32 %v55, 4294901760
    %v336 = vsub.f32 %v55, %v335
    %337 = vmatpush1.xpose.msra.mxu0 %v336
    %338 = vmatprep.subr.mxu0 0.0
    %v339 = vand.u32 %v54, 4294901760
    %v340 = vsub.f32 %v54, %v339
    %341 = vmatpush1.xpose.msra.mxu0 %v340
    %342 = vmatprep.subr.mxu0 0.0
    %v343 = vand.u32 %v53, 4294901760
    %v344 = vsub.f32 %v53, %v343
    %345 = vmatpush1.xpose.msra.mxu0 %v344
    %346 = vmatprep.subr.mxu0 0.0
    %v347 = vand.u32 %v52, 4294901760
    %v348 = vsub.f32 %v52, %v347
    %349 = vmatpush1.xpose.msra.mxu0 %v348
    %350 = vmatprep.subr.mxu0 0.0
    %v351 = vand.u32 %v51, 4294901760
    %v352 = vsub.f32 %v51, %v351
    %353 = vmatpush1.xpose.msra.mxu0 %v352
    %354 = vmatprep.subr.mxu0 0.0
    %v355 = vand.u32 %v50, 4294901760
    %v356 = vsub.f32 %v50, %v355
    %357 = vmatpush1.xpose.msra.mxu0 %v356
    %358 = vmatprep.subr.mxu0 0.0
    %v359 = vand.u32 %v49, 4294901760
    %v360 = vsub.f32 %v49, %v359
    %361 = vmatpush1.xpose.msra.mxu0 %v360
    %362 = vmatprep.subr.mxu0 0.0
    %v363 = vand.u32 %v48, 4294901760
    %v364 = vsub.f32 %v48, %v363
    %365 = vmatpush1.xpose.msra.mxu0 %v364
    %366 = vmatprep.subr.mxu0 0.0
    %v367 = vand.u32 %v47, 4294901760
    %v368 = vsub.f32 %v47, %v367
    %369 = vmatpush1.xpose.msra.mxu0 %v368
    %370 = vmatprep.subr.mxu0 0.0
    %371 = vmatpush2.xpose.msra.mxu0 0.0
    %372 = vmatprep.subr.mxu0 0.0
    %373 = vmatpush2.xpose.msra.mxu0 0.0
    %374 = vmatprep.subr.mxu0 0.0
    %375 = vmatpush2.xpose.msra.mxu0 0.0
    %376 = vmatprep.subr.mxu0 0.0
    %377 = vmatpush2.xpose.msra.mxu0 0.0
    %378 = vmatprep.subr.mxu0 0.0
    %379 = vmatpush2.xpose.msra.mxu0 0.0
    %380 = vmatprep.subr.mxu0 0.0
    %381 = vmatpush2.xpose.msra.mxu0 0.0
    %382 = vmatprep.subr.mxu0 0.0
    %383 = vmatpush2.xpose.msra.mxu0 0.0
    %384 = vmatprep.subr.mxu0 0.0
    %385 = vmatpush2.xpose.msra.mxu0 0.0
    %386 = vmatprep.subr.mxu0 0.0
    %387 = vmatpush2.xpose.msra.mxu0 0.0
    %388 = vmatprep.subr.mxu0 0.0
    %389 = vmatpush2.xpose.msra.mxu0 0.0
    %390 = vmatprep.subr.mxu0 0.0
    %391 = vmatpush2.xpose.msra.mxu0 0.0
    %392 = vmatprep.subr.mxu0 0.0
    %393 = vmatpush2.xpose.msra.mxu0 0.0
    %394 = vmatprep.subr.mxu0 0.0
    %395 = vmatpush2.xpose.msra.mxu0 0.0
    %396 = vmatprep.subr.mxu0 0.0
    %397 = vmatpush2.xpose.msra.mxu0 0.0
    %398 = vmatprep.subr.mxu0 0.0
    %399 = vmatpush2.xpose.msra.mxu0 0.0
    %400 = vmatprep.subr.mxu0 0.0
    %401 = vmatpush2.xpose.msra.mxu0 0.0
    %402 = vmatprep.mubr.f32.mxu0 0.0
    %v403 = vand.u32 %v46, 4294901760
    %v404 = vsub.f32 %v46, %v403
    %405 = vmatmul.mubr.f32.gmra.mxu0 %v404
    %v406 = vpop.f32.mrf.mxu0
    %v407 = vadd.f32 %v303, %v406
    %v408 = vpop.f32.mrf.mxu0
    %409 = vdwg.mxu0
    %410 = vmatprep.subr.mxu0 0.0
    %v411 = vand.u32 %v62, 4294901760
    %412 = vmatpush1.xpose.msra.mxu0 %v411
    %413 = vmatprep.subr.mxu0 0.0
    %v414 = vand.u32 %v61, 4294901760
    %415 = vmatpush1.xpose.msra.mxu0 %v414
    %416 = vmatprep.subr.mxu0 0.0
    %v417 = vand.u32 %v60, 4294901760
    %418 = vmatpush1.xpose.msra.mxu0 %v417
    %419 = vmatprep.subr.mxu0 0.0
    %v420 = vand.u32 %v59, 4294901760
    %421 = vmatpush1.xpose.msra.mxu0 %v420
    %422 = vmatprep.subr.mxu0 0.0
    %v423 = vand.u32 %v58, 4294901760
    %424 = vmatpush1.xpose.msra.mxu0 %v423
    %425 = vmatprep.subr.mxu0 0.0
    %v426 = vand.u32 %v57, 4294901760
    %427 = vmatpush1.xpose.msra.mxu0 %v426
    %428 = vmatprep.subr.mxu0 0.0
    %v429 = vand.u32 %v56, 4294901760
    %430 = vmatpush1.xpose.msra.mxu0 %v429
    %431 = vmatprep.subr.mxu0 0.0
    %v432 = vand.u32 %v55, 4294901760
    %433 = vmatpush1.xpose.msra.mxu0 %v432
    %434 = vmatprep.subr.mxu0 0.0
    %v435 = vand.u32 %v54, 4294901760
    %436 = vmatpush1.xpose.msra.mxu0 %v435
    %437 = vmatprep.subr.mxu0 0.0
    %v438 = vand.u32 %v53, 4294901760
    %439 = vmatpush1.xpose.msra.mxu0 %v438
    %440 = vmatprep.subr.mxu0 0.0
    %v441 = vand.u32 %v52, 4294901760
    %442 = vmatpush1.xpose.msra.mxu0 %v441
    %443 = vmatprep.subr.mxu0 0.0
    %v444 = vand.u32 %v51, 4294901760
    %445 = vmatpush1.xpose.msra.mxu0 %v444
    %446 = vmatprep.subr.mxu0 0.0
    %v447 = vand.u32 %v50, 4294901760
    %448 = vmatpush1.xpose.msra.mxu0 %v447
    %449 = vmatprep.subr.mxu0 0.0
    %v450 = vand.u32 %v49, 4294901760
    %451 = vmatpush1.xpose.msra.mxu0 %v450
    %452 = vmatprep.subr.mxu0 0.0
    %v453 = vand.u32 %v48, 4294901760
    %454 = vmatpush1.xpose.msra.mxu0 %v453
    %455 = vmatprep.subr.mxu0 0.0
    %v456 = vand.u32 %v47, 4294901760
    %457 = vmatpush1.xpose.msra.mxu0 %v456
    %458 = vmatprep.subr.mxu0 0.0
    %459 = vmatpush2.xpose.msra.mxu0 0.0
    %460 = vmatprep.subr.mxu0 0.0
    %461 = vmatpush2.xpose.msra.mxu0 0.0
    %462 = vmatprep.subr.mxu0 0.0
    %463 = vmatpush2.xpose.msra.mxu0 0.0
    %464 = vmatprep.subr.mxu0 0.0
    %465 = vmatpush2.xpose.msra.mxu0 0.0
    %466 = vmatprep.subr.mxu0 0.0
    %467 = vmatpush2.xpose.msra.mxu0 0.0
    %468 = vmatprep.subr.mxu0 0.0
    %469 = vmatpush2.xpose.msra.mxu0 0.0
    %470 = vmatprep.subr.mxu0 0.0
    %471 = vmatpush2.xpose.msra.mxu0 0.0
    %472 = vmatprep.subr.mxu0 0.0
    %473 = vmatpush2.xpose.msra.mxu0 0.0
    %474 = vmatprep.subr.mxu0 0.0
    %475 = vmatpush2.xpose.msra.mxu0 0.0
    %476 = vmatprep.subr.mxu0 0.0
    %477 = vmatpush2.xpose.msra.mxu0 0.0
    %478 = vmatprep.subr.mxu0 0.0
    %479 = vmatpush2.xpose.msra.mxu0 0.0
    %480 = vmatprep.subr.mxu0 0.0
    %481 = vmatpush2.xpose.msra.mxu0 0.0
    %482 = vmatprep.subr.mxu0 0.0
    %483 = vmatpush2.xpose.msra.mxu0 0.0
    %484 = vmatprep.subr.mxu0 0.0
    %485 = vmatpush2.xpose.msra.mxu0 0.0
    %486 = vmatprep.subr.mxu0 0.0
    %487 = vmatpush2.xpose.msra.mxu0 0.0
    %488 = vmatprep.subr.mxu0 0.0
    %489 = vmatpush2.xpose.msra.mxu0 0.0
    %490 = vmatprep.mubr.f32.mxu0 0.0
    %v491 = vand.u32 %v46, 4294901760
    %v492 = vsub.f32 %v46, %v491
    %v493 = vand.u32 %v492, 4294901760
    %494 = vmatmul.mubr.f32.gmra.mxu0 %v493
    %v495 = vpop.f32.mrf.mxu0
    %v496 = vadd.f32 %v407, %v495
    %v497 = vpop.f32.mrf.mxu0
    %498 = vdwg.mxu0
    %499 = vmatprep.subr.mxu0 0.0
    %v500 = vand.u32 %v62, 4294901760
    %v501 = vsub.f32 %v62, %v500
    %v502 = vand.u32 %v501, 4294901760
    %503 = vmatpush1.xpose.msra.mxu0 %v502
    %504 = vmatprep.subr.mxu0 0.0
    %v505 = vand.u32 %v61, 4294901760
    %v506 = vsub.f32 %v61, %v505
    %v507 = vand.u32 %v506, 4294901760
    %508 = vmatpush1.xpose.msra.mxu0 %v507
    %509 = vmatprep.subr.mxu0 0.0
    %v510 = vand.u32 %v60, 4294901760
    %v511 = vsub.f32 %v60, %v510
    %v512 = vand.u32 %v511, 4294901760
    %513 = vmatpush1.xpose.msra.mxu0 %v512
    %514 = vmatprep.subr.mxu0 0.0
    %v515 = vand.u32 %v59, 4294901760
    %v516 = vsub.f32 %v59, %v515
    %v517 = vand.u32 %v516, 4294901760
    %518 = vmatpush1.xpose.msra.mxu0 %v517
    %519 = vmatprep.subr.mxu0 0.0
    %v520 = vand.u32 %v58, 4294901760
    %v521 = vsub.f32 %v58, %v520
    %v522 = vand.u32 %v521, 4294901760
    %523 = vmatpush1.xpose.msra.mxu0 %v522
    %524 = vmatprep.subr.mxu0 0.0
    %v525 = vand.u32 %v57, 4294901760
    %v526 = vsub.f32 %v57, %v525
    %v527 = vand.u32 %v526, 4294901760
    %528 = vmatpush1.xpose.msra.mxu0 %v527
    %529 = vmatprep.subr.mxu0 0.0
    %v530 = vand.u32 %v56, 4294901760
    %v531 = vsub.f32 %v56, %v530
    %v532 = vand.u32 %v531, 4294901760
    %533 = vmatpush1.xpose.msra.mxu0 %v532
    %534 = vmatprep.subr.mxu0 0.0
    %v535 = vand.u32 %v55, 4294901760
    %v536 = vsub.f32 %v55, %v535
    %v537 = vand.u32 %v536, 4294901760
    %538 = vmatpush1.xpose.msra.mxu0 %v537
    %539 = vmatprep.subr.mxu0 0.0
    %v540 = vand.u32 %v54, 4294901760
    %v541 = vsub.f32 %v54, %v540
    %v542 = vand.u32 %v541, 4294901760
    %543 = vmatpush1.xpose.msra.mxu0 %v542
    %544 = vmatprep.subr.mxu0 0.0
    %v545 = vand.u32 %v53, 4294901760
    %v546 = vsub.f32 %v53, %v545
    %v547 = vand.u32 %v546, 4294901760
    %548 = vmatpush1.xpose.msra.mxu0 %v547
    %549 = vmatprep.subr.mxu0 0.0
    %v550 = vand.u32 %v52, 4294901760
    %v551 = vsub.f32 %v52, %v550
    %v552 = vand.u32 %v551, 4294901760
    %553 = vmatpush1.xpose.msra.mxu0 %v552
    %554 = vmatprep.subr.mxu0 0.0
    %v555 = vand.u32 %v51, 4294901760
    %v556 = vsub.f32 %v51, %v555
    %v557 = vand.u32 %v556, 4294901760
    %558 = vmatpush1.xpose.msra.mxu0 %v557
    %559 = vmatprep.subr.mxu0 0.0
    %v560 = vand.u32 %v50, 4294901760
    %v561 = vsub.f32 %v50, %v560
    %v562 = vand.u32 %v561, 4294901760
    %563 = vmatpush1.xpose.msra.mxu0 %v562
    %564 = vmatprep.subr.mxu0 0.0
    %v565 = vand.u32 %v49, 4294901760
    %v566 = vsub.f32 %v49, %v565
    %v567 = vand.u32 %v566, 4294901760
    %568 = vmatpush1.xpose.msra.mxu0 %v567
    %569 = vmatprep.subr.mxu0 0.0
    %v570 = vand.u32 %v48, 4294901760
    %v571 = vsub.f32 %v48, %v570
    %v572 = vand.u32 %v571, 4294901760
    %573 = vmatpush1.xpose.msra.mxu0 %v572
    %574 = vmatprep.subr.mxu0 0.0
    %v575 = vand.u32 %v47, 4294901760
    %v576 = vsub.f32 %v47, %v575
    %v577 = vand.u32 %v576, 4294901760
    %578 = vmatpush1.xpose.msra.mxu0 %v577
    %579 = vmatprep.subr.mxu0 0.0
    %580 = vmatpush2.xpose.msra.mxu0 0.0
    %581 = vmatprep.subr.mxu0 0.0
    %582 = vmatpush2.xpose.msra.mxu0 0.0
    %583 = vmatprep.subr.mxu0 0.0
    %584 = vmatpush2.xpose.msra.mxu0 0.0
    %585 = vmatprep.subr.mxu0 0.0
    %586 = vmatpush2.xpose.msra.mxu0 0.0
    %587 = vmatprep.subr.mxu0 0.0
    %588 = vmatpush2.xpose.msra.mxu0 0.0
    %589 = vmatprep.subr.mxu0 0.0
    %590 = vmatpush2.xpose.msra.mxu0 0.0
    %591 = vmatprep.subr.mxu0 0.0
    %592 = vmatpush2.xpose.msra.mxu0 0.0
    %593 = vmatprep.subr.mxu0 0.0
    %594 = vmatpush2.xpose.msra.mxu0 0.0
    %595 = vmatprep.subr.mxu0 0.0
    %596 = vmatpush2.xpose.msra.mxu0 0.0
    %597 = vmatprep.subr.mxu0 0.0
    %598 = vmatpush2.xpose.msra.mxu0 0.0
    %599 = vmatprep.subr.mxu0 0.0
    %600 = vmatpush2.xpose.msra.mxu0 0.0
    %601 = vmatprep.subr.mxu0 0.0
    %602 = vmatpush2.xpose.msra.mxu0 0.0
    %603 = vmatprep.subr.mxu0 0.0
    %604 = vmatpush2.xpose.msra.mxu0 0.0
    %605 = vmatprep.subr.mxu0 0.0
    %606 = vmatpush2.xpose.msra.mxu0 0.0
    %607 = vmatprep.subr.mxu0 0.0
    %608 = vmatpush2.xpose.msra.mxu0 0.0
    %609 = vmatprep.subr.mxu0 0.0
    %610 = vmatpush2.xpose.msra.mxu0 0.0
    %611 = vmatprep.mubr.f32.mxu0 0.0
    %v612 = vand.u32 %v46, 4294901760
    %613 = vmatmul.mubr.f32.gmra.mxu0 %v612
    %v614 = vpop.f32.mrf.mxu0
    %v615 = vadd.f32 %v496, %v614
    %v616 = vpop.f32.mrf.mxu0
    %617 = vdwg.mxu0
    %618 = vmatprep.subr.mxu0 0.0
    %v619 = vand.u32 %v62, 4294901760
    %620 = vmatpush1.xpose.msra.mxu0 %v619
    %621 = vmatprep.subr.mxu0 0.0
    %v622 = vand.u32 %v61, 4294901760
    %623 = vmatpush1.xpose.msra.mxu0 %v622
    %624 = vmatprep.subr.mxu0 0.0
    %v625 = vand.u32 %v60, 4294901760
    %626 = vmatpush1.xpose.msra.mxu0 %v625
    %627 = vmatprep.subr.mxu0 0.0
    %v628 = vand.u32 %v59, 4294901760
    %629 = vmatpush1.xpose.msra.mxu0 %v628
    %630 = vmatprep.subr.mxu0 0.0
    %v631 = vand.u32 %v58, 4294901760
    %632 = vmatpush1.xpose.msra.mxu0 %v631
    %633 = vmatprep.subr.mxu0 0.0
    %v634 = vand.u32 %v57, 4294901760
    %635 = vmatpush1.xpose.msra.mxu0 %v634
    %636 = vmatprep.subr.mxu0 0.0
    %v637 = vand.u32 %v56, 4294901760
    %638 = vmatpush1.xpose.msra.mxu0 %v637
    %639 = vmatprep.subr.mxu0 0.0
    %v640 = vand.u32 %v55, 4294901760
    %641 = vmatpush1.xpose.msra.mxu0 %v640
    %642 = vmatprep.subr.mxu0 0.0
    %v643 = vand.u32 %v54, 4294901760
    %644 = vmatpush1.xpose.msra.mxu0 %v643
    %645 = vmatprep.subr.mxu0 0.0
    %v646 = vand.u32 %v53, 4294901760
    %647 = vmatpush1.xpose.msra.mxu0 %v646
    %648 = vmatprep.subr.mxu0 0.0
    %v649 = vand.u32 %v52, 4294901760
    %650 = vmatpush1.xpose.msra.mxu0 %v649
    %651 = vmatprep.subr.mxu0 0.0
    %v652 = vand.u32 %v51, 4294901760
    %653 = vmatpush1.xpose.msra.mxu0 %v652
    %654 = vmatprep.subr.mxu0 0.0
    %v655 = vand.u32 %v50, 4294901760
    %656 = vmatpush1.xpose.msra.mxu0 %v655
    %657 = vmatprep.subr.mxu0 0.0
    %v658 = vand.u32 %v49, 4294901760
    %659 = vmatpush1.xpose.msra.mxu0 %v658
    %660 = vmatprep.subr.mxu0 0.0
    %v661 = vand.u32 %v48, 4294901760
    %662 = vmatpush1.xpose.msra.mxu0 %v661
    %663 = vmatprep.subr.mxu0 0.0
    %v664 = vand.u32 %v47, 4294901760
    %665 = vmatpush1.xpose.msra.mxu0 %v664
    %666 = vmatprep.subr.mxu0 0.0
    %667 = vmatpush2.xpose.msra.mxu0 0.0
    %668 = vmatprep.subr.mxu0 0.0
    %669 = vmatpush2.xpose.msra.mxu0 0.0
    %670 = vmatprep.subr.mxu0 0.0
    %671 = vmatpush2.xpose.msra.mxu0 0.0
    %672 = vmatprep.subr.mxu0 0.0
    %673 = vmatpush2.xpose.msra.mxu0 0.0
    %674 = vmatprep.subr.mxu0 0.0
    %675 = vmatpush2.xpose.msra.mxu0 0.0
    %676 = vmatprep.subr.mxu0 0.0
    %677 = vmatpush2.xpose.msra.mxu0 0.0
    %678 = vmatprep.subr.mxu0 0.0
    %679 = vmatpush2.xpose.msra.mxu0 0.0
    %680 = vmatprep.subr.mxu0 0.0
    %681 = vmatpush2.xpose.msra.mxu0 0.0
    %682 = vmatprep.subr.mxu0 0.0
    %683 = vmatpush2.xpose.msra.mxu0 0.0
    %684 = vmatprep.subr.mxu0 0.0
    %685 = vmatpush2.xpose.msra.mxu0 0.0
    %686 = vmatprep.subr.mxu0 0.0
    %687 = vmatpush2.xpose.msra.mxu0 0.0
    %688 = vmatprep.subr.mxu0 0.0
    %689 = vmatpush2.xpose.msra.mxu0 0.0
    %690 = vmatprep.subr.mxu0 0.0
    %691 = vmatpush2.xpose.msra.mxu0 0.0
    %692 = vmatprep.subr.mxu0 0.0
    %693 = vmatpush2.xpose.msra.mxu0 0.0
    %694 = vmatprep.subr.mxu0 0.0
    %695 = vmatpush2.xpose.msra.mxu0 0.0
    %696 = vmatprep.subr.mxu0 0.0
    %697 = vmatpush2.xpose.msra.mxu0 0.0
    %698 = vmatprep.mubr.f32.mxu0 0.0
    %v699 = vand.u32 %v46, 4294901760
    %700 = vmatmul.mubr.f32.gmra.mxu0 %v699
    %v701 = vpop.f32.mrf.mxu0
    %v702 = vadd.f32 %v615, %v701
    %v703 = vpop.f32.mrf.mxu0
    %704 = vdwg.mxu0
    %v705 = vadd.f32 %v63, %v702
    %706 = vst [vmem:[#allocation2] sm:$0xff] %v705
    %v707 = vld [vmem:[#allocation3] sm:$0xff]
    %v708 = vmul.f32 %v46, %v46
    %709 = vadd.xlane.f32.xlu0 %v708
    %v710 = vpop.xlane.xlu0 %709
    %v711 = vadd.f32 %v707, %v710
    %vm712 = vcmask 7168
    %713 = vst.msk [vmem:[#allocation3] sm:$0xff] %vm712, %v711
    %v714 = vld [vmem:[#allocation4] sm:$0x1]
    %v715 = vmul.f32 %v47, %v47
    %v716 = vmul.f32 %v48, %v48
    %v717 = vmul.f32 %v49, %v49
    %v718 = vmul.f32 %v50, %v50
    %v719 = vmul.f32 %v51, %v51
    %v720 = vmul.f32 %v52, %v52
    %v721 = vmul.f32 %v53, %v53
    %v722 = vmul.f32 %v54, %v54
    %v723 = vmul.f32 %v55, %v55
    %v724 = vmul.f32 %v56, %v56
    %v725 = vmul.f32 %v57, %v57
    %v726 = vmul.f32 %v58, %v58
    %v727 = vmul.f32 %v59, %v59
    %v728 = vmul.f32 %v60, %v60
    %v729 = vmul.f32 %v61, %v61
    %v730 = vmul.f32 %v62, %v62
    %731 = vmatprep.subr.mxu0 0.0
    %v732 = vand.u32 %v730, 4294901760
    %733 = vmatpush1.xpose.msra.mxu0 %v732
    %734 = vmatprep.subr.mxu0 0.0
    %v735 = vand.u32 %v729, 4294901760
    %736 = vmatpush1.xpose.msra.mxu0 %v735
    %737 = vmatprep.subr.mxu0 0.0
    %v738 = vand.u32 %v728, 4294901760
    %739 = vmatpush1.xpose.msra.mxu0 %v738
    %740 = vmatprep.subr.mxu0 0.0
    %v741 = vand.u32 %v727, 4294901760
    %742 = vmatpush1.xpose.msra.mxu0 %v741
    %743 = vmatprep.subr.mxu0 0.0
    %v744 = vand.u32 %v726, 4294901760
    %745 = vmatpush1.xpose.msra.mxu0 %v744
    %746 = vmatprep.subr.mxu0 0.0
    %v747 = vand.u32 %v725, 4294901760
    %748 = vmatpush1.xpose.msra.mxu0 %v747
    %749 = vmatprep.subr.mxu0 0.0
    %v750 = vand.u32 %v724, 4294901760
    %751 = vmatpush1.xpose.msra.mxu0 %v750
    %752 = vmatprep.subr.mxu0 0.0
    %v753 = vand.u32 %v723, 4294901760
    %754 = vmatpush1.xpose.msra.mxu0 %v753
    %755 = vmatprep.subr.mxu0 0.0
    %v756 = vand.u32 %v722, 4294901760
    %757 = vmatpush1.xpose.msra.mxu0 %v756
    %758 = vmatprep.subr.mxu0 0.0
    %v759 = vand.u32 %v721, 4294901760
    %760 = vmatpush1.xpose.msra.mxu0 %v759
    %761 = vmatprep.subr.mxu0 0.0
    %v762 = vand.u32 %v720, 4294901760
    %763 = vmatpush1.xpose.msra.mxu0 %v762
    %764 = vmatprep.subr.mxu0 0.0
    %v765 = vand.u32 %v719, 4294901760
    %766 = vmatpush1.xpose.msra.mxu0 %v765
    %767 = vmatprep.subr.mxu0 0.0
    %v768 = vand.u32 %v718, 4294901760
    %769 = vmatpush1.xpose.msra.mxu0 %v768
    %770 = vmatprep.subr.mxu0 0.0
    %v771 = vand.u32 %v717, 4294901760
    %772 = vmatpush1.xpose.msra.mxu0 %v771
    %773 = vmatprep.subr.mxu0 0.0
    %v774 = vand.u32 %v716, 4294901760
    %775 = vmatpush1.xpose.msra.mxu0 %v774
    %776 = vmatprep.subr.mxu0 0.0
    %v777 = vand.u32 %v715, 4294901760
    %778 = vmatpush1.xpose.msra.mxu0 %v777
    %779 = vmatprep.subr.mxu0 0.0
    %780 = vmatpush2.xpose.msra.mxu0 0.0
    %781 = vmatprep.subr.mxu0 0.0
    %782 = vmatpush2.xpose.msra.mxu0 0.0
    %783 = vmatprep.subr.mxu0 0.0
    %784 = vmatpush2.xpose.msra.mxu0 0.0
    %785 = vmatprep.subr.mxu0 0.0
    %786 = vmatpush2.xpose.msra.mxu0 0.0
    %787 = vmatprep.subr.mxu0 0.0
    %788 = vmatpush2.xpose.msra.mxu0 0.0
    %789 = vmatprep.subr.mxu0 0.0
    %790 = vmatpush2.xpose.msra.mxu0 0.0
    %791 = vmatprep.subr.mxu0 0.0
    %792 = vmatpush2.xpose.msra.mxu0 0.0
    %793 = vmatprep.subr.mxu0 0.0
    %794 = vmatpush2.xpose.msra.mxu0 0.0
    %795 = vmatprep.subr.mxu0 0.0
    %796 = vmatpush2.xpose.msra.mxu0 0.0
    %797 = vmatprep.subr.mxu0 0.0
    %798 = vmatpush2.xpose.msra.mxu0 0.0
    %799 = vmatprep.subr.mxu0 0.0
    %800 = vmatpush2.xpose.msra.mxu0 0.0
    %801 = vmatprep.subr.mxu0 0.0
    %802 = vmatpush2.xpose.msra.mxu0 0.0
    %803 = vmatprep.subr.mxu0 0.0
    %804 = vmatpush2.xpose.msra.mxu0 0.0
    %805 = vmatprep.subr.mxu0 0.0
    %806 = vmatpush2.xpose.msra.mxu0 0.0
    %807 = vmatprep.subr.mxu0 0.0
    %808 = vmatpush2.xpose.msra.mxu0 0.0
    %809 = vmatprep.subr.mxu0 0.0
    %810 = vmatpush2.xpose.msra.mxu0 0.0
    %811 = vmatprep.mubr.f32.mxu0 0.0
    %812 = vmatmul.mubr.f32.gmra.mxu0 0.0
    %v813 = vpop.f32.mrf.mxu0
    %v814 = vadd.f32 0.0, %v813
    %v815 = vpop.f32.mrf.mxu0
    %816 = vdwg.mxu0
    %817 = vmatprep.subr.mxu0 0.0
    %v818 = vand.u32 %v730, 4294901760
    %v819 = vsub.f32 %v730, %v818
    %v820 = vand.u32 %v819, 4294901760
    %v821 = vsub.f32 %v819, %v820
    %v822 = vand.u32 %v821, 4294901760
    %823 = vmatpush1.xpose.msra.mxu0 %v822
    %824 = vmatprep.subr.mxu0 0.0
    %v825 = vand.u32 %v729, 4294901760
    %v826 = vsub.f32 %v729, %v825
    %v827 = vand.u32 %v826, 4294901760
    %v828 = vsub.f32 %v826, %v827
    %v829 = vand.u32 %v828, 4294901760
    %830 = vmatpush1.xpose.msra.mxu0 %v829
    %831 = vmatprep.subr.mxu0 0.0
    %v832 = vand.u32 %v728, 4294901760
    %v833 = vsub.f32 %v728, %v832
    %v834 = vand.u32 %v833, 4294901760
    %v835 = vsub.f32 %v833, %v834
    %v836 = vand.u32 %v835, 4294901760
    %837 = vmatpush1.xpose.msra.mxu0 %v836
    %838 = vmatprep.subr.mxu0 0.0
    %v839 = vand.u32 %v727, 4294901760
    %v840 = vsub.f32 %v727, %v839
    %v841 = vand.u32 %v840, 4294901760
    %v842 = vsub.f32 %v840, %v841
    %v843 = vand.u32 %v842, 4294901760
    %844 = vmatpush1.xpose.msra.mxu0 %v843
    %845 = vmatprep.subr.mxu0 0.0
    %v846 = vand.u32 %v726, 4294901760
    %v847 = vsub.f32 %v726, %v846
    %v848 = vand.u32 %v847, 4294901760
    %v849 = vsub.f32 %v847, %v848
    %v850 = vand.u32 %v849, 4294901760
    %851 = vmatpush1.xpose.msra.mxu0 %v850
    %852 = vmatprep.subr.mxu0 0.0
    %v853 = vand.u32 %v725, 4294901760
    %v854 = vsub.f32 %v725, %v853
    %v855 = vand.u32 %v854, 4294901760
    %v856 = vsub.f32 %v854, %v855
    %v857 = vand.u32 %v856, 4294901760
    %858 = vmatpush1.xpose.msra.mxu0 %v857
    %859 = vmatprep.subr.mxu0 0.0
    %v860 = vand.u32 %v724, 4294901760
    %v861 = vsub.f32 %v724, %v860
    %v862 = vand.u32 %v861, 4294901760
    %v863 = vsub.f32 %v861, %v862
    %v864 = vand.u32 %v863, 4294901760
    %865 = vmatpush1.xpose.msra.mxu0 %v864
    %866 = vmatprep.subr.mxu0 0.0
    %v867 = vand.u32 %v723, 4294901760
    %v868 = vsub.f32 %v723, %v867
    %v869 = vand.u32 %v868, 4294901760
    %v870 = vsub.f32 %v868, %v869
    %v871 = vand.u32 %v870, 4294901760
    %872 = vmatpush1.xpose.msra.mxu0 %v871
    %873 = vmatprep.subr.mxu0 0.0
    %v874 = vand.u32 %v722, 4294901760
    %v875 = vsub.f32 %v722, %v874
    %v876 = vand.u32 %v875, 4294901760
    %v877 = vsub.f32 %v875, %v876
    %v878 = vand.u32 %v877, 4294901760
    %879 = vmatpush1.xpose.msra.mxu0 %v878
    %880 = vmatprep.subr.mxu0 0.0
    %v881 = vand.u32 %v721, 4294901760
    %v882 = vsub.f32 %v721, %v881
    %v883 = vand.u32 %v882, 4294901760
    %v884 = vsub.f32 %v882, %v883
    %v885 = vand.u32 %v884, 4294901760
    %886 = vmatpush1.xpose.msra.mxu0 %v885
    %887 = vmatprep.subr.mxu0 0.0
    %v888 = vand.u32 %v720, 4294901760
    %v889 = vsub.f32 %v720, %v888
    %v890 = vand.u32 %v889, 4294901760
    %v891 = vsub.f32 %v889, %v890
    %v892 = vand.u32 %v891, 4294901760
    %893 = vmatpush1.xpose.msra.mxu0 %v892
    %894 = vmatprep.subr.mxu0 0.0
    %v895 = vand.u32 %v719, 4294901760
    %v896 = vsub.f32 %v719, %v895
    %v897 = vand.u32 %v896, 4294901760
    %v898 = vsub.f32 %v896, %v897
    %v899 = vand.u32 %v898, 4294901760
    %900 = vmatpush1.xpose.msra.mxu0 %v899
    %901 = vmatprep.subr.mxu0 0.0
    %v902 = vand.u32 %v718, 4294901760
    %v903 = vsub.f32 %v718, %v902
    %v904 = vand.u32 %v903, 4294901760
    %v905 = vsub.f32 %v903, %v904
    %v906 = vand.u32 %v905, 4294901760
    %907 = vmatpush1.xpose.msra.mxu0 %v906
    %908 = vmatprep.subr.mxu0 0.0
    %v909 = vand.u32 %v717, 4294901760
    %v910 = vsub.f32 %v717, %v909
    %v911 = vand.u32 %v910, 4294901760
    %v912 = vsub.f32 %v910, %v911
    %v913 = vand.u32 %v912, 4294901760
    %914 = vmatpush1.xpose.msra.mxu0 %v913
    %915 = vmatprep.subr.mxu0 0.0
    %v916 = vand.u32 %v716, 4294901760
    %v917 = vsub.f32 %v716, %v916
    %v918 = vand.u32 %v917, 4294901760
    %v919 = vsub.f32 %v917, %v918
    %v920 = vand.u32 %v919, 4294901760
    %921 = vmatpush1.xpose.msra.mxu0 %v920
    %922 = vmatprep.subr.mxu0 0.0
    %v923 = vand.u32 %v715, 4294901760
    %v924 = vsub.f32 %v715, %v923
    %v925 = vand.u32 %v924, 4294901760
    %v926 = vsub.f32 %v924, %v925
    %v927 = vand.u32 %v926, 4294901760
    %928 = vmatpush1.xpose.msra.mxu0 %v927
    %929 = vmatprep.subr.mxu0 0.0
    %930 = vmatpush2.xpose.msra.mxu0 0.0
    %931 = vmatprep.subr.mxu0 0.0
    %932 = vmatpush2.xpose.msra.mxu0 0.0
    %933 = vmatprep.subr.mxu0 0.0
    %934 = vmatpush2.xpose.msra.mxu0 0.0
    %935 = vmatprep.subr.mxu0 0.0
    %936 = vmatpush2.xpose.msra.mxu0 0.0
    %937 = vmatprep.subr.mxu0 0.0
    %938 = vmatpush2.xpose.msra.mxu0 0.0
    %939 = vmatprep.subr.mxu0 0.0
    %940 = vmatpush2.xpose.msra.mxu0 0.0
    %941 = vmatprep.subr.mxu0 0.0
    %942 = vmatpush2.xpose.msra.mxu0 0.0
    %943 = vmatprep.subr.mxu0 0.0
    %944 = vmatpush2.xpose.msra.mxu0 0.0
    %945 = vmatprep.subr.mxu0 0.0
    %946 = vmatpush2.xpose.msra.mxu0 0.0
    %947 = vmatprep.subr.mxu0 0.0
    %948 = vmatpush2.xpose.msra.mxu0 0.0
    %949 = vmatprep.subr.mxu0 0.0
    %950 = vmatpush2.xpose.msra.mxu0 0.0
    %951 = vmatprep.subr.mxu0 0.0
    %952 = vmatpush2.xpose.msra.mxu0 0.0
    %953 = vmatprep.subr.mxu0 0.0
    %954 = vmatpush2.xpose.msra.mxu0 0.0
    %955 = vmatprep.subr.mxu0 0.0
    %956 = vmatpush2.xpose.msra.mxu0 0.0
    %957 = vmatprep.subr.mxu0 0.0
    %958 = vmatpush2.xpose.msra.mxu0 0.0
    %959 = vmatprep.subr.mxu0 0.0
    %960 = vmatpush2.xpose.msra.mxu0 0.0
    %961 = vmatprep.mubr.f32.mxu0 0.0
    %962 = vmatmul.mubr.f32.gmra.mxu0 1.0
    %v963 = vpop.f32.mrf.mxu0
    %v964 = vadd.f32 %v814, %v963
    %v965 = vpop.f32.mrf.mxu0
    %966 = vdwg.mxu0
    %967 = vmatprep.subr.mxu0 0.0
    %v968 = vand.u32 %v730, 4294901760
    %v969 = vsub.f32 %v730, %v968
    %970 = vmatpush1.xpose.msra.mxu0 %v969
    %971 = vmatprep.subr.mxu0 0.0
    %v972 = vand.u32 %v729, 4294901760
    %v973 = vsub.f32 %v729, %v972
    %974 = vmatpush1.xpose.msra.mxu0 %v973
    %975 = vmatprep.subr.mxu0 0.0
    %v976 = vand.u32 %v728, 4294901760
    %v977 = vsub.f32 %v728, %v976
    %978 = vmatpush1.xpose.msra.mxu0 %v977
    %979 = vmatprep.subr.mxu0 0.0
    %v980 = vand.u32 %v727, 4294901760
    %v981 = vsub.f32 %v727, %v980
    %982 = vmatpush1.xpose.msra.mxu0 %v981
    %983 = vmatprep.subr.mxu0 0.0
    %v984 = vand.u32 %v726, 4294901760
    %v985 = vsub.f32 %v726, %v984
    %986 = vmatpush1.xpose.msra.mxu0 %v985
    %987 = vmatprep.subr.mxu0 0.0
    %v988 = vand.u32 %v725, 4294901760
    %v989 = vsub.f32 %v725, %v988
    %990 = vmatpush1.xpose.msra.mxu0 %v989
    %991 = vmatprep.subr.mxu0 0.0
    %v992 = vand.u32 %v724, 4294901760
    %v993 = vsub.f32 %v724, %v992
    %994 = vmatpush1.xpose.msra.mxu0 %v993
    %995 = vmatprep.subr.mxu0 0.0
    %v996 = vand.u32 %v723, 4294901760
    %v997 = vsub.f32 %v723, %v996
    %998 = vmatpush1.xpose.msra.mxu0 %v997
    %999 = vmatprep.subr.mxu0 0.0
    %v1000 = vand.u32 %v722, 4294901760
    %v1001 = vsub.f32 %v722, %v1000
    %1002 = vmatpush1.xpose.msra.mxu0 %v1001
    %1003 = vmatprep.subr.mxu0 0.0
    %v1004 = vand.u32 %v721, 4294901760
    %v1005 = vsub.f32 %v721, %v1004
    %1006 = vmatpush1.xpose.msra.mxu0 %v1005
    %1007 = vmatprep.subr.mxu0 0.0
    %v1008 = vand.u32 %v720, 4294901760
    %v1009 = vsub.f32 %v720, %v1008
    %1010 = vmatpush1.xpose.msra.mxu0 %v1009
    %1011 = vmatprep.subr.mxu0 0.0
    %v1012 = vand.u32 %v719, 4294901760
    %v1013 = vsub.f32 %v719, %v1012
    %1014 = vmatpush1.xpose.msra.mxu0 %v1013
    %1015 = vmatprep.subr.mxu0 0.0
    %v1016 = vand.u32 %v718, 4294901760
    %v1017 = vsub.f32 %v718, %v1016
    %1018 = vmatpush1.xpose.msra.mxu0 %v1017
    %1019 = vmatprep.subr.mxu0 0.0
    %v1020 = vand.u32 %v717, 4294901760
    %v1021 = vsub.f32 %v717, %v1020
    %1022 = vmatpush1.xpose.msra.mxu0 %v1021
    %1023 = vmatprep.subr.mxu0 0.0
    %v1024 = vand.u32 %v716, 4294901760
    %v1025 = vsub.f32 %v716, %v1024
    %1026 = vmatpush1.xpose.msra.mxu0 %v1025
    %1027 = vmatprep.subr.mxu0 0.0
    %v1028 = vand.u32 %v715, 4294901760
    %v1029 = vsub.f32 %v715, %v1028
    %1030 = vmatpush1.xpose.msra.mxu0 %v1029
    %1031 = vmatprep.subr.mxu0 0.0
    %1032 = vmatpush2.xpose.msra.mxu0 0.0
    %1033 = vmatprep.subr.mxu0 0.0
    %1034 = vmatpush2.xpose.msra.mxu0 0.0
    %1035 = vmatprep.subr.mxu0 0.0
    %1036 = vmatpush2.xpose.msra.mxu0 0.0
    %1037 = vmatprep.subr.mxu0 0.0
    %1038 = vmatpush2.xpose.msra.mxu0 0.0
    %1039 = vmatprep.subr.mxu0 0.0
    %1040 = vmatpush2.xpose.msra.mxu0 0.0
    %1041 = vmatprep.subr.mxu0 0.0
    %1042 = vmatpush2.xpose.msra.mxu0 0.0
    %1043 = vmatprep.subr.mxu0 0.0
    %1044 = vmatpush2.xpose.msra.mxu0 0.0
    %1045 = vmatprep.subr.mxu0 0.0
    %1046 = vmatpush2.xpose.msra.mxu0 0.0
    %1047 = vmatprep.subr.mxu0 0.0
    %1048 = vmatpush2.xpose.msra.mxu0 0.0
    %1049 = vmatprep.subr.mxu0 0.0
    %1050 = vmatpush2.xpose.msra.mxu0 0.0
    %1051 = vmatprep.subr.mxu0 0.0
    %1052 = vmatpush2.xpose.msra.mxu0 0.0
    %1053 = vmatprep.subr.mxu0 0.0
    %1054 = vmatpush2.xpose.msra.mxu0 0.0
    %1055 = vmatprep.subr.mxu0 0.0
    %1056 = vmatpush2.xpose.msra.mxu0 0.0
    %1057 = vmatprep.subr.mxu0 0.0
    %1058 = vmatpush2.xpose.msra.mxu0 0.0
    %1059 = vmatprep.subr.mxu0 0.0
    %1060 = vmatpush2.xpose.msra.mxu0 0.0
    %1061 = vmatprep.subr.mxu0 0.0
    %1062 = vmatpush2.xpose.msra.mxu0 0.0
    %1063 = vmatprep.mubr.f32.mxu0 0.0
    %1064 = vmatmul.mubr.f32.gmra.mxu0 0.0
    %v1065 = vpop.f32.mrf.mxu0
    %v1066 = vadd.f32 %v964, %v1065
    %v1067 = vpop.f32.mrf.mxu0
    %1068 = vdwg.mxu0
    %1069 = vmatprep.subr.mxu0 0.0
    %v1070 = vand.u32 %v730, 4294901760
    %1071 = vmatpush1.xpose.msra.mxu0 %v1070
    %1072 = vmatprep.subr.mxu0 0.0
    %v1073 = vand.u32 %v729, 4294901760
    %1074 = vmatpush1.xpose.msra.mxu0 %v1073
    %1075 = vmatprep.subr.mxu0 0.0
    %v1076 = vand.u32 %v728, 4294901760
    %1077 = vmatpush1.xpose.msra.mxu0 %v1076
    %1078 = vmatprep.subr.mxu0 0.0
    %v1079 = vand.u32 %v727, 4294901760
    %1080 = vmatpush1.xpose.msra.mxu0 %v1079
    %1081 = vmatprep.subr.mxu0 0.0
    %v1082 = vand.u32 %v726, 4294901760
    %1083 = vmatpush1.xpose.msra.mxu0 %v1082
    %1084 = vmatprep.subr.mxu0 0.0
    %v1085 = vand.u32 %v725, 4294901760
    %1086 = vmatpush1.xpose.msra.mxu0 %v1085
    %1087 = vmatprep.subr.mxu0 0.0
    %v1088 = vand.u32 %v724, 4294901760
    %1089 = vmatpush1.xpose.msra.mxu0 %v1088
    %1090 = vmatprep.subr.mxu0 0.0
    %v1091 = vand.u32 %v723, 4294901760
    %1092 = vmatpush1.xpose.msra.mxu0 %v1091
    %1093 = vmatprep.subr.mxu0 0.0
    %v1094 = vand.u32 %v722, 4294901760
    %1095 = vmatpush1.xpose.msra.mxu0 %v1094
    %1096 = vmatprep.subr.mxu0 0.0
    %v1097 = vand.u32 %v721, 4294901760
    %1098 = vmatpush1.xpose.msra.mxu0 %v1097
    %1099 = vmatprep.subr.mxu0 0.0
    %v1100 = vand.u32 %v720, 4294901760
    %1101 = vmatpush1.xpose.msra.mxu0 %v1100
    %1102 = vmatprep.subr.mxu0 0.0
    %v1103 = vand.u32 %v719, 4294901760
    %1104 = vmatpush1.xpose.msra.mxu0 %v1103
    %1105 = vmatprep.subr.mxu0 0.0
    %v1106 = vand.u32 %v718, 4294901760
    %1107 = vmatpush1.xpose.msra.mxu0 %v1106
    %1108 = vmatprep.subr.mxu0 0.0
    %v1109 = vand.u32 %v717, 4294901760
    %1110 = vmatpush1.xpose.msra.mxu0 %v1109
    %1111 = vmatprep.subr.mxu0 0.0
    %v1112 = vand.u32 %v716, 4294901760
    %1113 = vmatpush1.xpose.msra.mxu0 %v1112
    %1114 = vmatprep.subr.mxu0 0.0
    %v1115 = vand.u32 %v715, 4294901760
    %1116 = vmatpush1.xpose.msra.mxu0 %v1115
    %1117 = vmatprep.subr.mxu0 0.0
    %1118 = vmatpush2.xpose.msra.mxu0 0.0
    %1119 = vmatprep.subr.mxu0 0.0
    %1120 = vmatpush2.xpose.msra.mxu0 0.0
    %1121 = vmatprep.subr.mxu0 0.0
    %1122 = vmatpush2.xpose.msra.mxu0 0.0
    %1123 = vmatprep.subr.mxu0 0.0
    %1124 = vmatpush2.xpose.msra.mxu0 0.0
    %1125 = vmatprep.subr.mxu0 0.0
    %1126 = vmatpush2.xpose.msra.mxu0 0.0
    %1127 = vmatprep.subr.mxu0 0.0
    %1128 = vmatpush2.xpose.msra.mxu0 0.0
    %1129 = vmatprep.subr.mxu0 0.0
    %1130 = vmatpush2.xpose.msra.mxu0 0.0
    %1131 = vmatprep.subr.mxu0 0.0
    %1132 = vmatpush2.xpose.msra.mxu0 0.0
    %1133 = vmatprep.subr.mxu0 0.0
    %1134 = vmatpush2.xpose.msra.mxu0 0.0
    %1135 = vmatprep.subr.mxu0 0.0
    %1136 = vmatpush2.xpose.msra.mxu0 0.0
    %1137 = vmatprep.subr.mxu0 0.0
    %1138 = vmatpush2.xpose.msra.mxu0 0.0
    %1139 = vmatprep.subr.mxu0 0.0
    %1140 = vmatpush2.xpose.msra.mxu0 0.0
    %1141 = vmatprep.subr.mxu0 0.0
    %1142 = vmatpush2.xpose.msra.mxu0 0.0
    %1143 = vmatprep.subr.mxu0 0.0
    %1144 = vmatpush2.xpose.msra.mxu0 0.0
    %1145 = vmatprep.subr.mxu0 0.0
    %1146 = vmatpush2.xpose.msra.mxu0 0.0
    %1147 = vmatprep.subr.mxu0 0.0
    %1148 = vmatpush2.xpose.msra.mxu0 0.0
    %1149 = vmatprep.mubr.f32.mxu0 0.0
    %1150 = vmatmul.mubr.f32.gmra.mxu0 0.0
    %v1151 = vpop.f32.mrf.mxu0
    %v1152 = vadd.f32 %v1066, %v1151
    %v1153 = vpop.f32.mrf.mxu0
    %1154 = vdwg.mxu0
    %1155 = vmatprep.subr.mxu0 0.0
    %v1156 = vand.u32 %v730, 4294901760
    %v1157 = vsub.f32 %v730, %v1156
    %v1158 = vand.u32 %v1157, 4294901760
    %1159 = vmatpush1.xpose.msra.mxu0 %v1158
    %1160 = vmatprep.subr.mxu0 0.0
    %v1161 = vand.u32 %v729, 4294901760
    %v1162 = vsub.f32 %v729, %v1161
    %v1163 = vand.u32 %v1162, 4294901760
    %1164 = vmatpush1.xpose.msra.mxu0 %v1163
    %1165 = vmatprep.subr.mxu0 0.0
    %v1166 = vand.u32 %v728, 4294901760
    %v1167 = vsub.f32 %v728, %v1166
    %v1168 = vand.u32 %v1167, 4294901760
    %1169 = vmatpush1.xpose.msra.mxu0 %v1168
    %1170 = vmatprep.subr.mxu0 0.0
    %v1171 = vand.u32 %v727, 4294901760
    %v1172 = vsub.f32 %v727, %v1171
    %v1173 = vand.u32 %v1172, 4294901760
    %1174 = vmatpush1.xpose.msra.mxu0 %v1173
    %1175 = vmatprep.subr.mxu0 0.0
    %v1176 = vand.u32 %v726, 4294901760
    %v1177 = vsub.f32 %v726, %v1176
    %v1178 = vand.u32 %v1177, 4294901760
    %1179 = vmatpush1.xpose.msra.mxu0 %v1178
    %1180 = vmatprep.subr.mxu0 0.0
    %v1181 = vand.u32 %v725, 4294901760
    %v1182 = vsub.f32 %v725, %v1181
    %v1183 = vand.u32 %v1182, 4294901760
    %1184 = vmatpush1.xpose.msra.mxu0 %v1183
    %1185 = vmatprep.subr.mxu0 0.0
    %v1186 = vand.u32 %v724, 4294901760
    %v1187 = vsub.f32 %v724, %v1186
    %v1188 = vand.u32 %v1187, 4294901760
    %1189 = vmatpush1.xpose.msra.mxu0 %v1188
    %1190 = vmatprep.subr.mxu0 0.0
    %v1191 = vand.u32 %v723, 4294901760
    %v1192 = vsub.f32 %v723, %v1191
    %v1193 = vand.u32 %v1192, 4294901760
    %1194 = vmatpush1.xpose.msra.mxu0 %v1193
    %1195 = vmatprep.subr.mxu0 0.0
    %v1196 = vand.u32 %v722, 4294901760
    %v1197 = vsub.f32 %v722, %v1196
    %v1198 = vand.u32 %v1197, 4294901760
    %1199 = vmatpush1.xpose.msra.mxu0 %v1198
    %1200 = vmatprep.subr.mxu0 0.0
    %v1201 = vand.u32 %v721, 4294901760
    %v1202 = vsub.f32 %v721, %v1201
    %v1203 = vand.u32 %v1202, 4294901760
    %1204 = vmatpush1.xpose.msra.mxu0 %v1203
    %1205 = vmatprep.subr.mxu0 0.0
    %v1206 = vand.u32 %v720, 4294901760
    %v1207 = vsub.f32 %v720, %v1206
    %v1208 = vand.u32 %v1207, 4294901760
    %1209 = vmatpush1.xpose.msra.mxu0 %v1208
    %1210 = vmatprep.subr.mxu0 0.0
    %v1211 = vand.u32 %v719, 4294901760
    %v1212 = vsub.f32 %v719, %v1211
    %v1213 = vand.u32 %v1212, 4294901760
    %1214 = vmatpush1.xpose.msra.mxu0 %v1213
    %1215 = vmatprep.subr.mxu0 0.0
    %v1216 = vand.u32 %v718, 4294901760
    %v1217 = vsub.f32 %v718, %v1216
    %v1218 = vand.u32 %v1217, 4294901760
    %1219 = vmatpush1.xpose.msra.mxu0 %v1218
    %1220 = vmatprep.subr.mxu0 0.0
    %v1221 = vand.u32 %v717, 4294901760
    %v1222 = vsub.f32 %v717, %v1221
    %v1223 = vand.u32 %v1222, 4294901760
    %1224 = vmatpush1.xpose.msra.mxu0 %v1223
    %1225 = vmatprep.subr.mxu0 0.0
    %v1226 = vand.u32 %v716, 4294901760
    %v1227 = vsub.f32 %v716, %v1226
    %v1228 = vand.u32 %v1227, 4294901760
    %1229 = vmatpush1.xpose.msra.mxu0 %v1228
    %1230 = vmatprep.subr.mxu0 0.0
    %v1231 = vand.u32 %v715, 4294901760
    %v1232 = vsub.f32 %v715, %v1231
    %v1233 = vand.u32 %v1232, 4294901760
    %1234 = vmatpush1.xpose.msra.mxu0 %v1233
    %1235 = vmatprep.subr.mxu0 0.0
    %1236 = vmatpush2.xpose.msra.mxu0 0.0
    %1237 = vmatprep.subr.mxu0 0.0
    %1238 = vmatpush2.xpose.msra.mxu0 0.0
    %1239 = vmatprep.subr.mxu0 0.0
    %1240 = vmatpush2.xpose.msra.mxu0 0.0
    %1241 = vmatprep.subr.mxu0 0.0
    %1242 = vmatpush2.xpose.msra.mxu0 0.0
    %1243 = vmatprep.subr.mxu0 0.0
    %1244 = vmatpush2.xpose.msra.mxu0 0.0
    %1245 = vmatprep.subr.mxu0 0.0
    %1246 = vmatpush2.xpose.msra.mxu0 0.0
    %1247 = vmatprep.subr.mxu0 0.0
    %1248 = vmatpush2.xpose.msra.mxu0 0.0
    %1249 = vmatprep.subr.mxu0 0.0
    %1250 = vmatpush2.xpose.msra.mxu0 0.0
    %1251 = vmatprep.subr.mxu0 0.0
    %1252 = vmatpush2.xpose.msra.mxu0 0.0
    %1253 = vmatprep.subr.mxu0 0.0
    %1254 = vmatpush2.xpose.msra.mxu0 0.0
    %1255 = vmatprep.subr.mxu0 0.0
    %1256 = vmatpush2.xpose.msra.mxu0 0.0
    %1257 = vmatprep.subr.mxu0 0.0
    %1258 = vmatpush2.xpose.msra.mxu0 0.0
    %1259 = vmatprep.subr.mxu0 0.0
    %1260 = vmatpush2.xpose.msra.mxu0 0.0
    %1261 = vmatprep.subr.mxu0 0.0
    %1262 = vmatpush2.xpose.msra.mxu0 0.0
    %1263 = vmatprep.subr.mxu0 0.0
    %1264 = vmatpush2.xpose.msra.mxu0 0.0
    %1265 = vmatprep.subr.mxu0 0.0
    %1266 = vmatpush2.xpose.msra.mxu0 0.0
    %1267 = vmatprep.mubr.f32.mxu0 0.0
    %1268 = vmatmul.mubr.f32.gmra.mxu0 1.0
    %v1269 = vpop.f32.mrf.mxu0
    %v1270 = vadd.f32 %v1152, %v1269
    %v1271 = vpop.f32.mrf.mxu0
    %1272 = vdwg.mxu0
    %1273 = vmatprep.subr.mxu0 0.0
    %v1274 = vand.u32 %v730, 4294901760
    %1275 = vmatpush1.xpose.msra.mxu0 %v1274
    %1276 = vmatprep.subr.mxu0 0.0
    %v1277 = vand.u32 %v729, 4294901760
    %1278 = vmatpush1.xpose.msra.mxu0 %v1277
    %1279 = vmatprep.subr.mxu0 0.0
    %v1280 = vand.u32 %v728, 4294901760
    %1281 = vmatpush1.xpose.msra.mxu0 %v1280
    %1282 = vmatprep.subr.mxu0 0.0
    %v1283 = vand.u32 %v727, 4294901760
    %1284 = vmatpush1.xpose.msra.mxu0 %v1283
    %1285 = vmatprep.subr.mxu0 0.0
    %v1286 = vand.u32 %v726, 4294901760
    %1287 = vmatpush1.xpose.msra.mxu0 %v1286
    %1288 = vmatprep.subr.mxu0 0.0
    %v1289 = vand.u32 %v725, 4294901760
    %1290 = vmatpush1.xpose.msra.mxu0 %v1289
    %1291 = vmatprep.subr.mxu0 0.0
    %v1292 = vand.u32 %v724, 4294901760
    %1293 = vmatpush1.xpose.msra.mxu0 %v1292
    %1294 = vmatprep.subr.mxu0 0.0
    %v1295 = vand.u32 %v723, 4294901760
    %1296 = vmatpush1.xpose.msra.mxu0 %v1295
    %1297 = vmatprep.subr.mxu0 0.0
    %v1298 = vand.u32 %v722, 4294901760
    %1299 = vmatpush1.xpose.msra.mxu0 %v1298
    %1300 = vmatprep.subr.mxu0 0.0
    %v1301 = vand.u32 %v721, 4294901760
    %1302 = vmatpush1.xpose.msra.mxu0 %v1301
    %1303 = vmatprep.subr.mxu0 0.0
    %v1304 = vand.u32 %v720, 4294901760
    %1305 = vmatpush1.xpose.msra.mxu0 %v1304
    %1306 = vmatprep.subr.mxu0 0.0
    %v1307 = vand.u32 %v719, 4294901760
    %1308 = vmatpush1.xpose.msra.mxu0 %v1307
    %1309 = vmatprep.subr.mxu0 0.0
    %v1310 = vand.u32 %v718, 4294901760
    %1311 = vmatpush1.xpose.msra.mxu0 %v1310
    %1312 = vmatprep.subr.mxu0 0.0
    %v1313 = vand.u32 %v717, 4294901760
    %1314 = vmatpush1.xpose.msra.mxu0 %v1313
    %1315 = vmatprep.subr.mxu0 0.0
    %v1316 = vand.u32 %v716, 4294901760
    %1317 = vmatpush1.xpose.msra.mxu0 %v1316
    %1318 = vmatprep.subr.mxu0 0.0
    %v1319 = vand.u32 %v715, 4294901760
    %1320 = vmatpush1.xpose.msra.mxu0 %v1319
    %1321 = vmatprep.subr.mxu0 0.0
    %1322 = vmatpush2.xpose.msra.mxu0 0.0
    %1323 = vmatprep.subr.mxu0 0.0
    %1324 = vmatpush2.xpose.msra.mxu0 0.0
    %1325 = vmatprep.subr.mxu0 0.0
    %1326 = vmatpush2.xpose.msra.mxu0 0.0
    %1327 = vmatprep.subr.mxu0 0.0
    %1328 = vmatpush2.xpose.msra.mxu0 0.0
    %1329 = vmatprep.subr.mxu0 0.0
    %1330 = vmatpush2.xpose.msra.mxu0 0.0
    %1331 = vmatprep.subr.mxu0 0.0
    %1332 = vmatpush2.xpose.msra.mxu0 0.0
    %1333 = vmatprep.subr.mxu0 0.0
    %1334 = vmatpush2.xpose.msra.mxu0 0.0
    %1335 = vmatprep.subr.mxu0 0.0
    %1336 = vmatpush2.xpose.msra.mxu0 0.0
    %1337 = vmatprep.subr.mxu0 0.0
    %1338 = vmatpush2.xpose.msra.mxu0 0.0
    %1339 = vmatprep.subr.mxu0 0.0
    %1340 = vmatpush2.xpose.msra.mxu0 0.0
    %1341 = vmatprep.subr.mxu0 0.0
    %1342 = vmatpush2.xpose.msra.mxu0 0.0
    %1343 = vmatprep.subr.mxu0 0.0
    %1344 = vmatpush2.xpose.msra.mxu0 0.0
    %1345 = vmatprep.subr.mxu0 0.0
    %1346 = vmatpush2.xpose.msra.mxu0 0.0
    %1347 = vmatprep.subr.mxu0 0.0
    %1348 = vmatpush2.xpose.msra.mxu0 0.0
    %1349 = vmatprep.subr.mxu0 0.0
    %1350 = vmatpush2.xpose.msra.mxu0 0.0
    %1351 = vmatprep.subr.mxu0 0.0
    %1352 = vmatpush2.xpose.msra.mxu0 0.0
    %1353 = vmatprep.mubr.f32.mxu0 0.0
    %1354 = vmatmul.mubr.f32.gmra.mxu0 1.0
    %v1355 = vpop.f32.mrf.mxu0
    %v1356 = vadd.f32 %v1270, %v1355
    %v1357 = vpop.f32.mrf.mxu0
    %1358 = vdwg.mxu0
    %v1359 = vadd.f32 %v714, %v1356
    %1360 = vst [vmem:[#allocation4] sm:$0x1] %v1359
    // Predicated region
    $region22: #{tpu_custom_call.1} parent=1 // pred_check
      %p1361 = pneg %p38
    $region23: #{tpu_custom_call.1} parent=1 // pred_check_branch
      %1363 = sbr.rel (%p1361) target = $region25
    $region24: #{tpu_custom_call.1} parent=1 // pred_region
      %v1364 = vld [vmem:[#allocation3] sm:$0xff]
      %v1365 = vld [vmem:[#allocation4] sm:$0x1]
      %1367 = vset.pattern.permute.xlu0 0
      %1368 = vperm.xlu0 %1367, %v1364
      %v1369 = vpop.permute.xlu0 %1368
      %v1372 = vlaneseq
      %v1373 = vshrl.u32 %v1372, 7
      %v1374 = vsub.s32 0, %v1373
      %v1375 = vrot.slane %v1365, %v1374
      %v1377 = vmul.f32 %v1369, %v1375
      %v1378 = vmax.f32 %v1377, 1e-16
      %v1379 = vld [vmem:[#allocation2] sm:$0xff]
      %v1380 = vrsqrt.pop %v1378
      %v1381 = vmul.f32 %v1379, %v1380
      %v1382 = vmul.f32 %v1381, 20.0
      %1383 = vst [vmem:[#allocation10] sm:$0xff] %v1382
    $region25: #{tpu_custom_call.1} parent=1 // pred_fallthru
      _
    // Predicated region
    $region26: #{tpu_custom_call.1} parent=1 // pred_check
      _
    $region27: #{tpu_custom_call.1} parent=1 // pred_check_branch
      %1385 = sbr.rel (0) target = $region29
    $region28: #{tpu_custom_call.1} parent=1 // pred_region
      %s1387 = ssub.s32 128, 128
      %1388 = vsyncadd [#allocation7], %s1387
      %s1390 = sshll.u32 [#allocation10], 4
      %s1391 = int_to_ptr.vmem [resolvable:$true] %s1390
      %1393 = dma.vmem_to_hbm [thread:$0]  %s1391, 128, %s2, [#allocation7]
    $region29: #{tpu_custom_call.1} parent=1 // pred_fallthru
      _
    // Predicated region
    $region30: #{tpu_custom_call.1} parent=1 // pred_check
      _
    $region31: #{tpu_custom_call.1} parent=1 // pred_check_branch
      %1395 = sbr.rel (0) target = $region33
    $region32: #{tpu_custom_call.1} parent=1 // pred_region
      %1396 = dma.done [#allocation7], 128
    $region33: #{tpu_custom_call.1} parent=1 // pred_fallthru
      _
    %1397 = vsyncpa [#allocation6], 1
    %1398 = vsyncpa [#allocation9], 1
    %1399 = vsyncpa [#allocation7], 1

</llo_original>
